<compile_context>
chip_gen: v5e
topology: v5e:2x2
jax: 0.10.0
libtpu: 0.0.40
codegen_flags: <defaults>
</compile_context>

<pallas_src>
import jax
import jax.numpy as jnp
from jax import lax
from jax.experimental import pallas as pl
from jax.experimental.pallas import tpu as pltpu

LANE = 128     # lane width; per-gate padded size and padded output width
SUBLANE = 8    # sublane tile; rows per time-step slab


def make_lstm_classifier_kernel(T, Bp, Hp):
    """Builds the kernel for static (T, Bp, Hp).

    Kernel refs (all full-array VMEM blocks):
      x_ref  : (T*Bp, D)   time-major input, Bp (=8k) zero-padded rows per timestep
      wih_ref: (D, 4*Hp)   input->gates weight, gate order (i,f,o,g), 128 lanes/gate
      whh_ref: (Hp, 4*Hp)  hidden->gates weight, rows and gate cols zero-padded
      b_ref  : (1, 4*Hp)   bias_ih + bias_hh, gate-padded, gate order (i,f,o,g)
      wfc_ref: (Hp, Cp)    fc weight (rows and cols zero-padded)
      bfc_ref: (1, Cp)     fc bias (cols zero-padded)
      out_ref: (Bp, Cp)    lane-dense logits tile; real logits are [:B, :C]
    """

    def kernel(x_ref, wih_ref, whh_ref, b_ref, wfc_ref, bfc_ref, out_ref):
        # ---- Hoisted input projection: one big matmul + single bias broadcast ----
        xg = (jnp.dot(x_ref[...], wih_ref[...],
                      preferred_element_type=jnp.float32)
              + b_ref[...])                      # (T*Bp, 4*Hp)

        whh = whh_ref[...]                       # load recurrent weight once

        h = jnp.zeros((Bp, Hp), jnp.float32)
        c = jnp.zeros((Bp, Hp), jnp.float32)

        # ---- Fully unrolled serial recurrence; h/c carried as values ----
        for t in range(T):
            gates = (xg[t * Bp:(t + 1) * Bp, :]           # (8,*) sublane-aligned slab
                     + jnp.dot(h, whh, preferred_element_type=jnp.float32))
            # Gate order is (i, f, o, g): one sigmoid over the 3*Hp slab, one tanh.
            ifo = jax.nn.sigmoid(gates[:, 0:3 * Hp])
            g = jnp.tanh(gates[:, 3 * Hp:4 * Hp])
            i = ifo[:, 0 * Hp:1 * Hp]                      # 128-lane-aligned slices
            f = ifo[:, 1 * Hp:2 * Hp]
            o = ifo[:, 2 * Hp:3 * Hp]
            c = f * c + i * g
            h = o * jnp.tanh(c)

        # ---- Final FC on the last hidden state; full lane-dense (Bp, Cp) store ----
        out_ref[...] = (jnp.dot(h, wfc_ref[...],
                                preferred_element_type=jnp.float32)
                        + bfc_ref[...])

    return kernel


def _reorder_and_pad_gates(w, H, Hp):
    """PyTorch gate order (i,f,g,o) -> (i,f,o,g); pad each gate block H->Hp with 0."""
    lead = w.shape[:-1]
    w4 = w.reshape(*lead, 4, H)
    w4 = w4[..., jnp.array([0, 1, 3, 2]), :]
    w4 = jnp.pad(w4, [(0, 0)] * len(lead) + [(0, 0), (0, Hp - H)])
    return w4.reshape(*lead, 4 * Hp)


def prepare_params(params, Hp=LANE, Cp=LANE):
    """One-time parameter preparation (gate permute + zero padding). Call once."""
    H = params["w_hh"].shape[0]
    C = params["w_fc"].shape[1]
    assert H <= Hp and C <= Cp
    wih_p = _reorder_and_pad_gates(params["w_ih"], H, Hp)                 # (D, 4Hp)
    whh_p = jnp.pad(_reorder_and_pad_gates(params["w_hh"], H, Hp),
                    ((0, Hp - H), (0, 0)))                                # (Hp, 4Hp)
    b_p = _reorder_and_pad_gates(params["b_ih"] + params["b_hh"],
                                 H, Hp).reshape(1, 4 * Hp)                # (1, 4Hp)
    wfc_p = jnp.pad(params["w_fc"], ((0, Hp - H), (0, Cp - C)))           # (Hp, Cp)
    bfc_p = jnp.pad(params["b_fc"], ((0, Cp - C),)).reshape(1, Cp)        # (1, Cp)
    return {"wih": wih_p, "whh": whh_p, "b": b_p, "wfc": wfc_p, "bfc": bfc_p,
            "H": H, "C": C, "Hp": Hp, "Cp": Cp}


def mfcc_lstm_classifier(x, prepared):
    """x: (B, T, D) batch_first, like the PyTorch module. Returns (B, num_classes)."""
    B, T, D = x.shape
    Hp, Cp, C = prepared["Hp"], prepared["Cp"], prepared["C"]
    Bp = ((B + SUBLANE - 1) // SUBLANE) * SUBLANE          # sublane-padded batch

    # Time-major, zero-pad batch rows to Bp, flatten to (T*Bp, D): one matmul for the
    # whole input projection and sublane-aligned per-step slabs inside the kernel.
    xt = jnp.transpose(x, (1, 0, 2))                       # (T, B, D)
    xt = jnp.pad(xt, ((0, 0), (0, Bp - B), (0, 0)))        # (T, Bp, D)
    x2d = xt.reshape(T * Bp, D)

    vmem = pl.BlockSpec(memory_space=pltpu.MemorySpace.VMEM)
    out = pl.pallas_call(
        make_lstm_classifier_kernel(T, Bp, Hp),
        out_shape=jax.ShapeDtypeStruct((Bp, Cp), jnp.float32),
        in_specs=[vmem] * 6,
        out_specs=vmem,
    )(x2d, prepared["wih"], prepared["whh"], prepared["b"],
      prepared["wfc"], prepared["bfc"])
    return out[:B, :C]


def reference(x, params):
    """Pure-JAX reference matching torch.nn.LSTM(batch_first=True) + Linear."""
    B, T, D = x.shape
    H = params["w_hh"].shape[0]
    h = jnp.zeros((B, H), jnp.float32)
    c = jnp.zeros((B, H), jnp.float32)
    b = params["b_ih"] + params["b_hh"]

    def step(carry, x_t):
        h, c = carry
        gates = x_t @ params["w_ih"] + h @ params["w_hh"] + b
        i, f, g, o = jnp.split(gates, 4, axis=-1)
        i, f, o = jax.nn.sigmoid(i), jax.nn.sigmoid(f), jax.nn.sigmoid(o)
        g = jnp.tanh(g)
        c = f * c + i * g
        h = o * jnp.tanh(c)
        return (h, c), None

    (h, _), _ = lax.scan(step, (h, c), jnp.transpose(x, (1, 0, 2)))
    return h @ params["w_fc"] + params["b_fc"]


if __name__ == "__main__":
    # Shapes consistent with the module defaults:
    # input_size=13 (MFCC), hidden_size=64, num_classes=3; batch=2, seq=8.
    B, T, D, H, C = 2, 8, 13, 64, 3

    key = jax.random.PRNGKey(0)
    keys = jax.random.split(key, 7)
    k = 1.0 / float(jnp.sqrt(H))  # PyTorch-style uniform(-1/sqrt(H), 1/sqrt(H)) init

    params = {
        "w_ih": jax.random.uniform(keys[0], (D, 4 * H), jnp.float32, -k, k),
        "w_hh": jax.random.uniform(keys[1], (H, 4 * H), jnp.float32, -k, k),
        "b_ih": jax.random.uniform(keys[2], (4 * H,), jnp.float32, -k, k),
        "b_hh": jax.random.uniform(keys[3], (4 * H,), jnp.float32, -k, k),
        "w_fc": jax.random.uniform(keys[4], (H, C), jnp.float32, -k, k),
        "b_fc": jax.random.uniform(keys[5], (C,), jnp.float32, -k, k),
    }
    x = jax.random.normal(keys[6], (B, T, D), jnp.float32)

    prepared = prepare_params(params)                     # one-time prep (hoisted)
    out = jax.block_until_ready(mfcc_lstm_classifier(x, prepared))
    ref = reference(x, params)

    assert out.shape == (B, C), out.shape
    assert jnp.allclose(out, ref, atol=1e-3, rtol=1e-3), (out, ref)
    print("KERNEL_OK")
</pallas_src>

<mosaic_0001>
module attributes {stable_mosaic.version = 11 : i64} {
  func.func @kernel(%arg0: memref<64x13xf32, #tpu.memory_space<vmem>>, %arg1: memref<13x512xf32, #tpu.memory_space<vmem>>, %arg2: memref<128x512xf32, #tpu.memory_space<vmem>>, %arg3: memref<1x512xf32, #tpu.memory_space<vmem>>, %arg4: memref<128x128xf32, #tpu.memory_space<vmem>>, %arg5: memref<1x128xf32, #tpu.memory_space<vmem>>, %arg6: memref<8x128xf32, #tpu.memory_space<vmem>>) attributes {dimension_semantics = [], scalar_prefetch = 0 : i64, scratch_operands = 0 : i64, tpu.core_type = #tpu.core_type<tc>} {
    %c0 = arith.constant 0 : index
    %c0_0 = arith.constant 0 : index
    %0 = vector.load %arg0[%c0, %c0_0] : memref<64x13xf32, #tpu.memory_space<vmem>>, vector<64x13xf32>
    %c0_1 = arith.constant 0 : index
    %c0_2 = arith.constant 0 : index
    %1 = vector.load %arg1[%c0_1, %c0_2] : memref<13x512xf32, #tpu.memory_space<vmem>>, vector<13x512xf32>
    %cst = arith.constant dense<0.000000e+00> : vector<64x512xf32>
    %2 = tpu.matmul %0, %1, %cst {dimension_numbers = #tpu.dot_dimension_numbers<[1], [0], [0], [1], [0, 0, 1, 1], [], []>} : vector<64x13xf32>, vector<13x512xf32>, vector<64x512xf32> -> vector<64x512xf32>
    %c0_3 = arith.constant 0 : index
    %c0_4 = arith.constant 0 : index
    %3 = vector.load %arg3[%c0_3, %c0_4] : memref<1x512xf32, #tpu.memory_space<vmem>>, vector<1x512xf32>
    %4 = vector.broadcast %3 : vector<1x512xf32> to vector<64x512xf32>
    %5 = arith.addf %2, %4 : vector<64x512xf32>
    %c0_5 = arith.constant 0 : index
    %c0_6 = arith.constant 0 : index
    %6 = vector.load %arg2[%c0_5, %c0_6] : memref<128x512xf32, #tpu.memory_space<vmem>>, vector<128x512xf32>
    %cst_7 = arith.constant 0.000000e+00 : f32
    %7 = vector.broadcast %cst_7 : f32 to vector<8x128xf32>
    %cst_8 = arith.constant 0.000000e+00 : f32
    %8 = vector.broadcast %cst_8 : f32 to vector<8x128xf32>
    %9 = vector.extract_strided_slice %5 {offsets = [0, 0], sizes = [8, 512], strides = [1, 1]} : vector<64x512xf32> to vector<8x512xf32>
    %cst_9 = arith.constant dense<0.000000e+00> : vector<8x512xf32>
    %10 = tpu.matmul %7, %6, %cst_9 {dimension_numbers = #tpu.dot_dimension_numbers<[1], [0], [0], [1], [0, 0, 1, 1], [], []>} : vector<8x128xf32>, vector<128x512xf32>, vector<8x512xf32> -> vector<8x512xf32>
    %11 = arith.addf %9, %10 : vector<8x512xf32>
    %12 = vector.extract_strided_slice %11 {offsets = [0, 0], sizes = [8, 384], strides = [1, 1]} : vector<8x512xf32> to vector<8x384xf32>
    %13 = arith.negf %12 : vector<8x384xf32>
    %14 = math.exp %13 : vector<8x384xf32>
    %cst_10 = arith.constant 1.000000e+00 : f32
    %15 = vector.broadcast %cst_10 : f32 to vector<8x384xf32>
    %16 = arith.addf %15, %14 : vector<8x384xf32>
    %17 = arith.divf %15, %16 : vector<8x384xf32>
    %18 = vector.extract_strided_slice %11 {offsets = [0, 384], sizes = [8, 128], strides = [1, 1]} : vector<8x512xf32> to vector<8x128xf32>
    %19 = math.tanh %18 : vector<8x128xf32>
    %20 = vector.extract_strided_slice %17 {offsets = [0, 0], sizes = [8, 128], strides = [1, 1]} : vector<8x384xf32> to vector<8x128xf32>
    %21 = vector.extract_strided_slice %17 {offsets = [0, 128], sizes = [8, 128], strides = [1, 1]} : vector<8x384xf32> to vector<8x128xf32>
    %22 = vector.extract_strided_slice %17 {offsets = [0, 256], sizes = [8, 128], strides = [1, 1]} : vector<8x384xf32> to vector<8x128xf32>
    %23 = arith.mulf %21, %8 : vector<8x128xf32>
    %24 = arith.mulf %20, %19 : vector<8x128xf32>
    %25 = arith.addf %23, %24 : vector<8x128xf32>
    %26 = math.tanh %25 : vector<8x128xf32>
    %27 = arith.mulf %22, %26 : vector<8x128xf32>
    %28 = vector.extract_strided_slice %5 {offsets = [8, 0], sizes = [8, 512], strides = [1, 1]} : vector<64x512xf32> to vector<8x512xf32>
    %cst_11 = arith.constant dense<0.000000e+00> : vector<8x512xf32>
    %29 = tpu.matmul %27, %6, %cst_11 {dimension_numbers = #tpu.dot_dimension_numbers<[1], [0], [0], [1], [0, 0, 1, 1], [], []>} : vector<8x128xf32>, vector<128x512xf32>, vector<8x512xf32> -> vector<8x512xf32>
    %30 = arith.addf %28, %29 : vector<8x512xf32>
    %31 = vector.extract_strided_slice %30 {offsets = [0, 0], sizes = [8, 384], strides = [1, 1]} : vector<8x512xf32> to vector<8x384xf32>
    %32 = arith.negf %31 : vector<8x384xf32>
    %33 = math.exp %32 : vector<8x384xf32>
    %cst_12 = arith.constant 1.000000e+00 : f32
    %34 = vector.broadcast %cst_12 : f32 to vector<8x384xf32>
    %35 = arith.addf %34, %33 : vector<8x384xf32>
    %36 = arith.divf %34, %35 : vector<8x384xf32>
    %37 = vector.extract_strided_slice %30 {offsets = [0, 384], sizes = [8, 128], strides = [1, 1]} : vector<8x512xf32> to vector<8x128xf32>
    %38 = math.tanh %37 : vector<8x128xf32>
    %39 = vector.extract_strided_slice %36 {offsets = [0, 0], sizes = [8, 128], strides = [1, 1]} : vector<8x384xf32> to vector<8x128xf32>
    %40 = vector.extract_strided_slice %36 {offsets = [0, 128], sizes = [8, 128], strides = [1, 1]} : vector<8x384xf32> to vector<8x128xf32>
    %41 = vector.extract_strided_slice %36 {offsets = [0, 256], sizes = [8, 128], strides = [1, 1]} : vector<8x384xf32> to vector<8x128xf32>
    %42 = arith.mulf %40, %25 : vector<8x128xf32>
    %43 = arith.mulf %39, %38 : vector<8x128xf32>
    %44 = arith.addf %42, %43 : vector<8x128xf32>
    %45 = math.tanh %44 : vector<8x128xf32>
    %46 = arith.mulf %41, %45 : vector<8x128xf32>
    %47 = vector.extract_strided_slice %5 {offsets = [16, 0], sizes = [8, 512], strides = [1, 1]} : vector<64x512xf32> to vector<8x512xf32>
    %cst_13 = arith.constant dense<0.000000e+00> : vector<8x512xf32>
    %48 = tpu.matmul %46, %6, %cst_13 {dimension_numbers = #tpu.dot_dimension_numbers<[1], [0], [0], [1], [0, 0, 1, 1], [], []>} : vector<8x128xf32>, vector<128x512xf32>, vector<8x512xf32> -> vector<8x512xf32>
    %49 = arith.addf %47, %48 : vector<8x512xf32>
    %50 = vector.extract_strided_slice %49 {offsets = [0, 0], sizes = [8, 384], strides = [1, 1]} : vector<8x512xf32> to vector<8x384xf32>
    %51 = arith.negf %50 : vector<8x384xf32>
    %52 = math.exp %51 : vector<8x384xf32>
    %cst_14 = arith.constant 1.000000e+00 : f32
    %53 = vector.broadcast %cst_14 : f32 to vector<8x384xf32>
    %54 = arith.addf %53, %52 : vector<8x384xf32>
    %55 = arith.divf %53, %54 : vector<8x384xf32>
    %56 = vector.extract_strided_slice %49 {offsets = [0, 384], sizes = [8, 128], strides = [1, 1]} : vector<8x512xf32> to vector<8x128xf32>
    %57 = math.tanh %56 : vector<8x128xf32>
    %58 = vector.extract_strided_slice %55 {offsets = [0, 0], sizes = [8, 128], strides = [1, 1]} : vector<8x384xf32> to vector<8x128xf32>
    %59 = vector.extract_strided_slice %55 {offsets = [0, 128], sizes = [8, 128], strides = [1, 1]} : vector<8x384xf32> to vector<8x128xf32>
    %60 = vector.extract_strided_slice %55 {offsets = [0, 256], sizes = [8, 128], strides = [1, 1]} : vector<8x384xf32> to vector<8x128xf32>
    %61 = arith.mulf %59, %44 : vector<8x128xf32>
    %62 = arith.mulf %58, %57 : vector<8x128xf32>
    %63 = arith.addf %61, %62 : vector<8x128xf32>
    %64 = math.tanh %63 : vector<8x128xf32>
    %65 = arith.mulf %60, %64 : vector<8x128xf32>
    %66 = vector.extract_strided_slice %5 {offsets = [24, 0], sizes = [8, 512], strides = [1, 1]} : vector<64x512xf32> to vector<8x512xf32>
    %cst_15 = arith.constant dense<0.000000e+00> : vector<8x512xf32>
    %67 = tpu.matmul %65, %6, %cst_15 {dimension_numbers = #tpu.dot_dimension_numbers<[1], [0], [0], [1], [0, 0, 1, 1], [], []>} : vector<8x128xf32>, vector<128x512xf32>, vector<8x512xf32> -> vector<8x512xf32>
    %68 = arith.addf %66, %67 : vector<8x512xf32>
    %69 = vector.extract_strided_slice %68 {offsets = [0, 0], sizes = [8, 384], strides = [1, 1]} : vector<8x512xf32> to vector<8x384xf32>
    %70 = arith.negf %69 : vector<8x384xf32>
    %71 = math.exp %70 : vector<8x384xf32>
    %cst_16 = arith.constant 1.000000e+00 : f32
    %72 = vector.broadcast %cst_16 : f32 to vector<8x384xf32>
    %73 = arith.addf %72, %71 : vector<8x384xf32>
    %74 = arith.divf %72, %73 : vector<8x384xf32>
    %75 = vector.extract_strided_slice %68 {offsets = [0, 384], sizes = [8, 128], strides = [1, 1]} : vector<8x512xf32> to vector<8x128xf32>
    %76 = math.tanh %75 : vector<8x128xf32>
    %77 = vector.extract_strided_slice %74 {offsets = [0, 0], sizes = [8, 128], strides = [1, 1]} : vector<8x384xf32> to vector<8x128xf32>
    %78 = vector.extract_strided_slice %74 {offsets = [0, 128], sizes = [8, 128], strides = [1, 1]} : vector<8x384xf32> to vector<8x128xf32>
    %79 = vector.extract_strided_slice %74 {offsets = [0, 256], sizes = [8, 128], strides = [1, 1]} : vector<8x384xf32> to vector<8x128xf32>
    %80 = arith.mulf %78, %63 : vector<8x128xf32>
    %81 = arith.mulf %77, %76 : vector<8x128xf32>
    %82 = arith.addf %80, %81 : vector<8x128xf32>
    %83 = math.tanh %82 : vector<8x128xf32>
    %84 = arith.mulf %79, %83 : vector<8x128xf32>
    %85 = vector.extract_strided_slice %5 {offsets = [32, 0], sizes = [8, 512], strides = [1, 1]} : vector<64x512xf32> to vector<8x512xf32>
    %cst_17 = arith.constant dense<0.000000e+00> : vector<8x512xf32>
    %86 = tpu.matmul %84, %6, %cst_17 {dimension_numbers = #tpu.dot_dimension_numbers<[1], [0], [0], [1], [0, 0, 1, 1], [], []>} : vector<8x128xf32>, vector<128x512xf32>, vector<8x512xf32> -> vector<8x512xf32>
    %87 = arith.addf %85, %86 : vector<8x512xf32>
    %88 = vector.extract_strided_slice %87 {offsets = [0, 0], sizes = [8, 384], strides = [1, 1]} : vector<8x512xf32> to vector<8x384xf32>
    %89 = arith.negf %88 : vector<8x384xf32>
    %90 = math.exp %89 : vector<8x384xf32>
    %cst_18 = arith.constant 1.000000e+00 : f32
    %91 = vector.broadcast %cst_18 : f32 to vector<8x384xf32>
    %92 = arith.addf %91, %90 : vector<8x384xf32>
    %93 = arith.divf %91, %92 : vector<8x384xf32>
    %94 = vector.extract_strided_slice %87 {offsets = [0, 384], sizes = [8, 128], strides = [1, 1]} : vector<8x512xf32> to vector<8x128xf32>
    %95 = math.tanh %94 : vector<8x128xf32>
    %96 = vector.extract_strided_slice %93 {offsets = [0, 0], sizes = [8, 128], strides = [1, 1]} : vector<8x384xf32> to vector<8x128xf32>
    %97 = vector.extract_strided_slice %93 {offsets = [0, 128], sizes = [8, 128], strides = [1, 1]} : vector<8x384xf32> to vector<8x128xf32>
    %98 = vector.extract_strided_slice %93 {offsets = [0, 256], sizes = [8, 128], strides = [1, 1]} : vector<8x384xf32> to vector<8x128xf32>
    %99 = arith.mulf %97, %82 : vector<8x128xf32>
    %100 = arith.mulf %96, %95 : vector<8x128xf32>
    %101 = arith.addf %99, %100 : vector<8x128xf32>
    %102 = math.tanh %101 : vector<8x128xf32>
    %103 = arith.mulf %98, %102 : vector<8x128xf32>
    %104 = vector.extract_strided_slice %5 {offsets = [40, 0], sizes = [8, 512], strides = [1, 1]} : vector<64x512xf32> to vector<8x512xf32>
    %cst_19 = arith.constant dense<0.000000e+00> : vector<8x512xf32>
    %105 = tpu.matmul %103, %6, %cst_19 {dimension_numbers = #tpu.dot_dimension_numbers<[1], [0], [0], [1], [0, 0, 1, 1], [], []>} : vector<8x128xf32>, vector<128x512xf32>, vector<8x512xf32> -> vector<8x512xf32>
    %106 = arith.addf %104, %105 : vector<8x512xf32>
    %107 = vector.extract_strided_slice %106 {offsets = [0, 0], sizes = [8, 384], strides = [1, 1]} : vector<8x512xf32> to vector<8x384xf32>
    %108 = arith.negf %107 : vector<8x384xf32>
    %109 = math.exp %108 : vector<8x384xf32>
    %cst_20 = arith.constant 1.000000e+00 : f32
    %110 = vector.broadcast %cst_20 : f32 to vector<8x384xf32>
    %111 = arith.addf %110, %109 : vector<8x384xf32>
    %112 = arith.divf %110, %111 : vector<8x384xf32>
    %113 = vector.extract_strided_slice %106 {offsets = [0, 384], sizes = [8, 128], strides = [1, 1]} : vector<8x512xf32> to vector<8x128xf32>
    %114 = math.tanh %113 : vector<8x128xf32>
    %115 = vector.extract_strided_slice %112 {offsets = [0, 0], sizes = [8, 128], strides = [1, 1]} : vector<8x384xf32> to vector<8x128xf32>
    %116 = vector.extract_strided_slice %112 {offsets = [0, 128], sizes = [8, 128], strides = [1, 1]} : vector<8x384xf32> to vector<8x128xf32>
    %117 = vector.extract_strided_slice %112 {offsets = [0, 256], sizes = [8, 128], strides = [1, 1]} : vector<8x384xf32> to vector<8x128xf32>
    %118 = arith.mulf %116, %101 : vector<8x128xf32>
    %119 = arith.mulf %115, %114 : vector<8x128xf32>
    %120 = arith.addf %118, %119 : vector<8x128xf32>
    %121 = math.tanh %120 : vector<8x128xf32>
    %122 = arith.mulf %117, %121 : vector<8x128xf32>
    %123 = vector.extract_strided_slice %5 {offsets = [48, 0], sizes = [8, 512], strides = [1, 1]} : vector<64x512xf32> to vector<8x512xf32>
    %cst_21 = arith.constant dense<0.000000e+00> : vector<8x512xf32>
    %124 = tpu.matmul %122, %6, %cst_21 {dimension_numbers = #tpu.dot_dimension_numbers<[1], [0], [0], [1], [0, 0, 1, 1], [], []>} : vector<8x128xf32>, vector<128x512xf32>, vector<8x512xf32> -> vector<8x512xf32>
    %125 = arith.addf %123, %124 : vector<8x512xf32>
    %126 = vector.extract_strided_slice %125 {offsets = [0, 0], sizes = [8, 384], strides = [1, 1]} : vector<8x512xf32> to vector<8x384xf32>
    %127 = arith.negf %126 : vector<8x384xf32>
    %128 = math.exp %127 : vector<8x384xf32>
    %cst_22 = arith.constant 1.000000e+00 : f32
    %129 = vector.broadcast %cst_22 : f32 to vector<8x384xf32>
    %130 = arith.addf %129, %128 : vector<8x384xf32>
    %131 = arith.divf %129, %130 : vector<8x384xf32>
    %132 = vector.extract_strided_slice %125 {offsets = [0, 384], sizes = [8, 128], strides = [1, 1]} : vector<8x512xf32> to vector<8x128xf32>
    %133 = math.tanh %132 : vector<8x128xf32>
    %134 = vector.extract_strided_slice %131 {offsets = [0, 0], sizes = [8, 128], strides = [1, 1]} : vector<8x384xf32> to vector<8x128xf32>
    %135 = vector.extract_strided_slice %131 {offsets = [0, 128], sizes = [8, 128], strides = [1, 1]} : vector<8x384xf32> to vector<8x128xf32>
    %136 = vector.extract_strided_slice %131 {offsets = [0, 256], sizes = [8, 128], strides = [1, 1]} : vector<8x384xf32> to vector<8x128xf32>
    %137 = arith.mulf %135, %120 : vector<8x128xf32>
    %138 = arith.mulf %134, %133 : vector<8x128xf32>
    %139 = arith.addf %137, %138 : vector<8x128xf32>
    %140 = math.tanh %139 : vector<8x128xf32>
    %141 = arith.mulf %136, %140 : vector<8x128xf32>
    %142 = vector.extract_strided_slice %5 {offsets = [56, 0], sizes = [8, 512], strides = [1, 1]} : vector<64x512xf32> to vector<8x512xf32>
    %cst_23 = arith.constant dense<0.000000e+00> : vector<8x512xf32>
    %143 = tpu.matmul %141, %6, %cst_23 {dimension_numbers = #tpu.dot_dimension_numbers<[1], [0], [0], [1], [0, 0, 1, 1], [], []>} : vector<8x128xf32>, vector<128x512xf32>, vector<8x512xf32> -> vector<8x512xf32>
    %144 = arith.addf %142, %143 : vector<8x512xf32>
    %145 = vector.extract_strided_slice %144 {offsets = [0, 0], sizes = [8, 384], strides = [1, 1]} : vector<8x512xf32> to vector<8x384xf32>
    %146 = arith.negf %145 : vector<8x384xf32>
    %147 = math.exp %146 : vector<8x384xf32>
    %cst_24 = arith.constant 1.000000e+00 : f32
    %148 = vector.broadcast %cst_24 : f32 to vector<8x384xf32>
    %149 = arith.addf %148, %147 : vector<8x384xf32>
    %150 = arith.divf %148, %149 : vector<8x384xf32>
    %151 = vector.extract_strided_slice %144 {offsets = [0, 384], sizes = [8, 128], strides = [1, 1]} : vector<8x512xf32> to vector<8x128xf32>
    %152 = math.tanh %151 : vector<8x128xf32>
    %153 = vector.extract_strided_slice %150 {offsets = [0, 0], sizes = [8, 128], strides = [1, 1]} : vector<8x384xf32> to vector<8x128xf32>
    %154 = vector.extract_strided_slice %150 {offsets = [0, 128], sizes = [8, 128], strides = [1, 1]} : vector<8x384xf32> to vector<8x128xf32>
    %155 = vector.extract_strided_slice %150 {offsets = [0, 256], sizes = [8, 128], strides = [1, 1]} : vector<8x384xf32> to vector<8x128xf32>
    %156 = arith.mulf %154, %139 : vector<8x128xf32>
    %157 = arith.mulf %153, %152 : vector<8x128xf32>
    %158 = arith.addf %156, %157 : vector<8x128xf32>
    %159 = math.tanh %158 : vector<8x128xf32>
    %160 = arith.mulf %155, %159 : vector<8x128xf32>
    %c0_25 = arith.constant 0 : index
    %c0_26 = arith.constant 0 : index
    %161 = vector.load %arg4[%c0_25, %c0_26] : memref<128x128xf32, #tpu.memory_space<vmem>>, vector<128x128xf32>
    %cst_27 = arith.constant dense<0.000000e+00> : vector<8x128xf32>
    %162 = tpu.matmul %160, %161, %cst_27 {dimension_numbers = #tpu.dot_dimension_numbers<[1], [0], [0], [1], [0, 0, 1, 1], [], []>} : vector<8x128xf32>, vector<128x128xf32>, vector<8x128xf32> -> vector<8x128xf32>
    %c0_28 = arith.constant 0 : index
    %c0_29 = arith.constant 0 : index
    %163 = vector.load %arg5[%c0_28, %c0_29] : memref<1x128xf32, #tpu.memory_space<vmem>>, vector<1x128xf32>
    %164 = vector.broadcast %163 : vector<1x128xf32> to vector<8x128xf32>
    %165 = arith.addf %162, %164 : vector<8x128xf32>
    %c0_30 = arith.constant 0 : index
    %c0_31 = arith.constant 0 : index
    %166 = vector.load %arg6[%c0_30, %c0_31] : memref<8x128xf32, #tpu.memory_space<vmem>>, vector<8x128xf32>
    tpu.vector_store %arg6[%c0_30, %c0_31], %165 {strides = array<i32>} : memref<8x128xf32, #tpu.memory_space<vmem>>, vector<8x128xf32>,
    return
  }
}

</mosaic_0001>

<llo_original>
// kernel: tpu_custom_call.1
$region0: #{tpu_custom_call.1}
  #allocation0 [shape = 'u32[]', space=smem, size = 0x4, offset = 0x4, fixed_abs, tag = 'smem constant byte address 0x4 - core index']
  #allocation1 [shape = 'u32[72,128]{1,0:T(1,128)}', space=vmem, size = 0x9000, scoped, tag = 'internal scratch']
  %s0 = inlined_call_operand.vmem [shape: f32[64,13], index: 0, kind: input, shape index: {}]
  %s1 = inlined_call_operand.vmem [shape: f32[13,512], index: 1, kind: input, shape index: {}]
  %s2 = inlined_call_operand.hbm [shape: f32[128,512], index: 2, kind: input, shape index: {}]
  %s3 = inlined_call_operand.vmem [shape: f32[1,512], index: 3, kind: input, shape index: {}]
  %s4 = inlined_call_operand.hbm [shape: f32[128,128], index: 4, kind: input, shape index: {}]
  %s5 = inlined_call_operand.vmem [shape: f32[1,128], index: 5, kind: input, shape index: {}]
  %s6 = inlined_call_operand.hbm [shape: f32[8,128], index: 6, kind: output, shape index: {}]
  %s7 = sld [smem:[#allocation0]]
  $region42: #{tpu_custom_call.1} parent=0
    _
  %s9 = ssub.s32 1, %s7
  %s10 = scalar_select 0, %s9, %s7
  $region1: #{tpu_custom_call.1} parent=0
    #allocation2 [shape = 'u8[262144]{0}', space=vmem, size = 0x40000, scoped, tag = 'input window, operand 2, single buffered']
    #allocation3 [shape = 's32[1]{0}', space=sflag, size = 0x4, scoped, tag = 'scoped memory for tpu_custom_call.1']
    #allocation4 [shape = 's32[1]{0}', space=sflag, size = 0x4, scoped, tag = 'scoped memory for tpu_custom_call.1']
    #allocation5 [shape = 'u8[65536]{0}', space=vmem, size = 0x10000, scoped, tag = 'input window, operand 4, single buffered']
    #allocation6 [shape = 's32[1]{0}', space=sflag, size = 0x4, scoped, tag = 'scoped memory for tpu_custom_call.1']
    #allocation7 [shape = 'u8[4096]{0}', space=vmem, size = 0x1000, scoped, tag = 'output window, operand 0, single buffered']
    %11 = vsyncpa [#allocation3], 0
    %12 = vsyncpa [#allocation6], 0
    %13 = vsyncpa [#allocation4], 0
    // Predicated region
    $region2: #{tpu_custom_call.1} parent=1 // pred_check
      _
    $region3: #{tpu_custom_call.1} parent=1 // pred_check_branch
      %15 = sbr.rel (0) target = $region5
    $region4: #{tpu_custom_call.1} parent=1 // pred_region
      _
    $region5: #{tpu_custom_call.1} parent=1 // pred_fallthru
      _
    // Predicated region
    $region6: #{tpu_custom_call.1} parent=1 // pred_check
      _
    $region7: #{tpu_custom_call.1} parent=1 // pred_check_branch
      %17 = sbr.rel (0) target = $region9
    $region8: #{tpu_custom_call.1} parent=1 // pred_region
      _
    $region9: #{tpu_custom_call.1} parent=1 // pred_fallthru
      _
    // Predicated region
    $region10: #{tpu_custom_call.1} parent=1 // pred_check
      _
    $region11: #{tpu_custom_call.1} parent=1 // pred_check_branch
      %19 = sbr.rel (0) target = $region13
    $region12: #{tpu_custom_call.1} parent=1 // pred_region
      %21 = vsyncadd [#allocation3], 0
      %s22 = sshll.u32 %s2, 4
      %s23 = int_to_ptr.hbm [resolvable:$true] %s22
      %s24 = sshll.u32 [#allocation2], 4
      %s25 = int_to_ptr.vmem [resolvable:$true] %s24
      %30 = dma.hbm_to_vmem [thread:$0]  %s23, 8192, %s25, [#allocation3], 512, 512, 32
    $region13: #{tpu_custom_call.1} parent=1 // pred_fallthru
      _
    // Predicated region
    $region14: #{tpu_custom_call.1} parent=1 // pred_check
      _
    $region15: #{tpu_custom_call.1} parent=1 // pred_check_branch
      %32 = sbr.rel (0) target = $region17
    $region16: #{tpu_custom_call.1} parent=1 // pred_region
      _
    $region17: #{tpu_custom_call.1} parent=1 // pred_fallthru
      _
    // Predicated region
    $region18: #{tpu_custom_call.1} parent=1 // pred_check
      _
    $region19: #{tpu_custom_call.1} parent=1 // pred_check_branch
      %34 = sbr.rel (0) target = $region21
    $region20: #{tpu_custom_call.1} parent=1 // pred_region
      %36 = vsyncadd [#allocation6], 0
      %s37 = sshll.u32 %s4, 4
      %s38 = int_to_ptr.hbm [resolvable:$true] %s37
      %s39 = sshll.u32 [#allocation5], 4
      %s40 = int_to_ptr.vmem [resolvable:$true] %s39
      %45 = dma.hbm_to_vmem [thread:$0]  %s38, 2048, %s40, [#allocation6], 128, 128, 8
    $region21: #{tpu_custom_call.1} parent=1 // pred_fallthru
      _
    // Predicated region
    $region22: #{tpu_custom_call.1} parent=1 // pred_check
      _
    $region23: #{tpu_custom_call.1} parent=1 // pred_check_branch
      %47 = sbr.rel (0) target = $region25
    $region24: #{tpu_custom_call.1} parent=1 // pred_region
      _
    $region25: #{tpu_custom_call.1} parent=1 // pred_fallthru
      _
    // Predicated region
    $region26: #{tpu_custom_call.1} parent=1 // pred_check
      _
    $region27: #{tpu_custom_call.1} parent=1 // pred_check_branch
      %49 = sbr.rel (0) target = $region29
    $region28: #{tpu_custom_call.1} parent=1 // pred_region
      %51 = dma.done [#allocation3], 8192
    $region29: #{tpu_custom_call.1} parent=1 // pred_fallthru
      _
    // Predicated region
    $region30: #{tpu_custom_call.1} parent=1 // pred_check
      _
    $region31: #{tpu_custom_call.1} parent=1 // pred_check_branch
      %53 = sbr.rel (0) target = $region33
    $region32: #{tpu_custom_call.1} parent=1 // pred_region
      %55 = dma.done [#allocation6], 2048
    $region33: #{tpu_custom_call.1} parent=1 // pred_fallthru
      _
    %v56 = vld [vmem:[%s0] sm:$0xff]
    %v57 = vld [vmem:[%s0 + $0x8] sm:$0xff]
    %v58 = vld [vmem:[%s0 + $0x10] sm:$0xff]
    %v59 = vld [vmem:[%s0 + $0x18] sm:$0xff]
    %v60 = vld [vmem:[%s0 + $0x20] sm:$0xff]
    %v61 = vld [vmem:[%s0 + $0x28] sm:$0xff]
    %v62 = vld [vmem:[%s0 + $0x30] sm:$0xff]
    %v63 = vld [vmem:[%s0 + $0x38] sm:$0xff]
    %v64 = vld [vmem:[%s1] sm:$0xff]
    %v65 = vld [vmem:[%s1 + $0x8] sm:$0xff]
    %v66 = vld [vmem:[%s1 + $0x10] sm:$0xff]
    %v67 = vld [vmem:[%s1 + $0x18] sm:$0xff]
    %v68 = vld [vmem:[%s1 + $0x20] sm:$0x1f]
    %v69 = vld [vmem:[%s1 + $0x28] sm:$0x1f]
    %v70 = vld [vmem:[%s1 + $0x30] sm:$0x1f]
    %v71 = vld [vmem:[%s1 + $0x38] sm:$0x1f]
    %v72 = vld [vmem:[%s3] sm:$0xf]
    %v74 = vperm.slane %v72, 0
    %v75 = vperm.slane %v72, 1
    %v76 = vperm.slane %v72, 2
    %v77 = vperm.slane %v72, 3
    %vm82 = vcmask 105472
    %v84 = vsel %vm82, %v56, 0
    %v87 = vsel %vm82, %v57, 0
    %v90 = vsel %vm82, %v58, 0
    %v93 = vsel %vm82, %v59, 0
    %v96 = vsel %vm82, %v60, 0
    %v99 = vsel %vm82, %v61, 0
    %v102 = vsel %vm82, %v62, 0
    %v105 = vsel %vm82, %v63, 0
    %vm107 = vcmask 1044480
    %v109 = vsel %vm107, %v68, 0
    %v112 = vsel %vm107, %v69, 0
    %v115 = vsel %vm107, %v70, 0
    %v118 = vsel %vm107, %v71, 0
    %120 = vmatpush.msra.mxu0 0.0
    %121 = vmatpush.msra.mxu0 0.0
    %122 = vmatpush.msra.mxu0 0.0
    %123 = vmatpush.msra.mxu0 0.0
    %124 = vmatpush.msra.mxu0 0.0
    %125 = vmatpush.msra.mxu0 0.0
    %126 = vmatpush.msra.mxu0 0.0
    %127 = vmatpush.msra.mxu0 0.0
    %128 = vmatpush.msra.mxu0 0.0
    %129 = vmatpush.msra.mxu0 0.0
    %130 = vmatpush.msra.mxu0 0.0
    %131 = vmatpush.msra.mxu0 0.0
    %132 = vmatpush.msra.mxu0 0.0
    %133 = vmatpush.msra.mxu0 0.0
    %134 = vmatpush.msra.mxu0 %v109
    %135 = vmatpush.msra.mxu0 %v64
    %136 = vmatmul.f32.gmra.mxu0 %v84
    %v137 = vpop.f32.mrf.mxu0
    %v138 = vadd.f32 %v74, %v137
    %139 = vmatmul.f32.gmra.mxu0 %v87
    %v140 = vpop.f32.mrf.mxu0
    %v141 = vadd.f32 %v74, %v140
    %142 = vmatmul.f32.gmra.mxu0 %v90
    %v143 = vpop.f32.mrf.mxu0
    %v144 = vadd.f32 %v74, %v143
    %145 = vmatmul.f32.gmra.mxu0 %v93
    %v146 = vpop.f32.mrf.mxu0
    %v147 = vadd.f32 %v74, %v146
    %148 = vmatmul.f32.gmra.mxu0 %v96
    %v149 = vpop.f32.mrf.mxu0
    %v150 = vadd.f32 %v74, %v149
    %151 = vmatmul.f32.gmra.mxu0 %v99
    %v152 = vpop.f32.mrf.mxu0
    %v153 = vadd.f32 %v74, %v152
    %154 = vmatmul.f32.gmra.mxu0 %v102
    %v155 = vpop.f32.mrf.mxu0
    %v156 = vadd.f32 %v74, %v155
    %157 = vmatmul.f32.gmra.mxu0 %v105
    %v158 = vpop.f32.mrf.mxu0
    %v159 = vadd.f32 %v74, %v158
    %160 = vdwg.mxu0
    %161 = vmatpush.msra.mxu0 0.0
    %162 = vmatpush.msra.mxu0 0.0
    %163 = vmatpush.msra.mxu0 0.0
    %164 = vmatpush.msra.mxu0 0.0
    %165 = vmatpush.msra.mxu0 0.0
    %166 = vmatpush.msra.mxu0 0.0
    %167 = vmatpush.msra.mxu0 0.0
    %168 = vmatpush.msra.mxu0 0.0
    %169 = vmatpush.msra.mxu0 0.0
    %170 = vmatpush.msra.mxu0 0.0
    %171 = vmatpush.msra.mxu0 0.0
    %172 = vmatpush.msra.mxu0 0.0
    %173 = vmatpush.msra.mxu0 0.0
    %174 = vmatpush.msra.mxu0 0.0
    %175 = vmatpush.msra.mxu0 %v112
    %176 = vmatpush.msra.mxu0 %v65
    %177 = vmatmul.f32.gmra.mxu0 %v84
    %v178 = vpop.f32.mrf.mxu0
    %v179 = vadd.f32 %v75, %v178
    %180 = vmatmul.f32.gmra.mxu0 %v87
    %v181 = vpop.f32.mrf.mxu0
    %v182 = vadd.f32 %v75, %v181
    %183 = vmatmul.f32.gmra.mxu0 %v90
    %v184 = vpop.f32.mrf.mxu0
    %v185 = vadd.f32 %v75, %v184
    %186 = vmatmul.f32.gmra.mxu0 %v93
    %v187 = vpop.f32.mrf.mxu0
    %v188 = vadd.f32 %v75, %v187
    %189 = vmatmul.f32.gmra.mxu0 %v96
    %v190 = vpop.f32.mrf.mxu0
    %v191 = vadd.f32 %v75, %v190
    %192 = vmatmul.f32.gmra.mxu0 %v99
    %v193 = vpop.f32.mrf.mxu0
    %v194 = vadd.f32 %v75, %v193
    %195 = vmatmul.f32.gmra.mxu0 %v102
    %v196 = vpop.f32.mrf.mxu0
    %v197 = vadd.f32 %v75, %v196
    %198 = vmatmul.f32.gmra.mxu0 %v105
    %v199 = vpop.f32.mrf.mxu0
    %v200 = vadd.f32 %v75, %v199
    %201 = vdwg.mxu0
    %202 = vmatpush.msra.mxu0 0.0
    %203 = vmatpush.msra.mxu0 0.0
    %204 = vmatpush.msra.mxu0 0.0
    %205 = vmatpush.msra.mxu0 0.0
    %206 = vmatpush.msra.mxu0 0.0
    %207 = vmatpush.msra.mxu0 0.0
    %208 = vmatpush.msra.mxu0 0.0
    %209 = vmatpush.msra.mxu0 0.0
    %210 = vmatpush.msra.mxu0 0.0
    %211 = vmatpush.msra.mxu0 0.0
    %212 = vmatpush.msra.mxu0 0.0
    %213 = vmatpush.msra.mxu0 0.0
    %214 = vmatpush.msra.mxu0 0.0
    %215 = vmatpush.msra.mxu0 0.0
    %216 = vmatpush.msra.mxu0 %v115
    %217 = vmatpush.msra.mxu0 %v66
    %218 = vmatmul.f32.gmra.mxu0 %v84
    %v219 = vpop.f32.mrf.mxu0
    %v220 = vadd.f32 %v76, %v219
    %221 = vmatmul.f32.gmra.mxu0 %v87
    %v222 = vpop.f32.mrf.mxu0
    %v223 = vadd.f32 %v76, %v222
    %224 = vmatmul.f32.gmra.mxu0 %v90
    %v225 = vpop.f32.mrf.mxu0
    %v226 = vadd.f32 %v76, %v225
    %227 = vmatmul.f32.gmra.mxu0 %v93
    %v228 = vpop.f32.mrf.mxu0
    %v229 = vadd.f32 %v76, %v228
    %230 = vmatmul.f32.gmra.mxu0 %v96
    %v231 = vpop.f32.mrf.mxu0
    %v232 = vadd.f32 %v76, %v231
    %233 = vmatmul.f32.gmra.mxu0 %v99
    %v234 = vpop.f32.mrf.mxu0
    %v235 = vadd.f32 %v76, %v234
    %236 = vmatmul.f32.gmra.mxu0 %v102
    %v237 = vpop.f32.mrf.mxu0
    %v238 = vadd.f32 %v76, %v237
    %239 = vmatmul.f32.gmra.mxu0 %v105
    %v240 = vpop.f32.mrf.mxu0
    %v241 = vadd.f32 %v76, %v240
    %242 = vdwg.mxu0
    %243 = vmatpush.msra.mxu0 0.0
    %244 = vmatpush.msra.mxu0 0.0
    %245 = vmatpush.msra.mxu0 0.0
    %246 = vmatpush.msra.mxu0 0.0
    %247 = vmatpush.msra.mxu0 0.0
    %248 = vmatpush.msra.mxu0 0.0
    %249 = vmatpush.msra.mxu0 0.0
    %250 = vmatpush.msra.mxu0 0.0
    %251 = vmatpush.msra.mxu0 0.0
    %252 = vmatpush.msra.mxu0 0.0
    %253 = vmatpush.msra.mxu0 0.0
    %254 = vmatpush.msra.mxu0 0.0
    %255 = vmatpush.msra.mxu0 0.0
    %256 = vmatpush.msra.mxu0 0.0
    %257 = vmatpush.msra.mxu0 %v118
    %258 = vmatpush.msra.mxu0 %v67
    %259 = vmatmul.f32.gmra.mxu0 %v84
    %v260 = vpop.f32.mrf.mxu0
    %v261 = vadd.f32 %v77, %v260
    %262 = vmatmul.f32.gmra.mxu0 %v87
    %v263 = vpop.f32.mrf.mxu0
    %v264 = vadd.f32 %v77, %v263
    %265 = vmatmul.f32.gmra.mxu0 %v90
    %v266 = vpop.f32.mrf.mxu0
    %v267 = vadd.f32 %v77, %v266
    %268 = vmatmul.f32.gmra.mxu0 %v93
    %v269 = vpop.f32.mrf.mxu0
    %v270 = vadd.f32 %v77, %v269
    %271 = vmatmul.f32.gmra.mxu0 %v96
    %v272 = vpop.f32.mrf.mxu0
    %v273 = vadd.f32 %v77, %v272
    %274 = vmatmul.f32.gmra.mxu0 %v99
    %v275 = vpop.f32.mrf.mxu0
    %v276 = vadd.f32 %v77, %v275
    %277 = vmatmul.f32.gmra.mxu0 %v102
    %v278 = vpop.f32.mrf.mxu0
    %v279 = vadd.f32 %v77, %v278
    %280 = vmatmul.f32.gmra.mxu0 %v105
    %v281 = vpop.f32.mrf.mxu0
    %v282 = vadd.f32 %v77, %v281
    %283 = vdwg.mxu0
    %v284 = vld [vmem:[#allocation2] sm:$0xff]
    %v285 = vld [vmem:[#allocation2 + $0x8] sm:$0xff]
    %v286 = vld [vmem:[#allocation2 + $0x10] sm:$0xff]
    %v287 = vld [vmem:[#allocation2 + $0x18] sm:$0xff]
    %v288 = vld [vmem:[#allocation2 + $0x20] sm:$0xff]
    %v289 = vld [vmem:[#allocation2 + $0x28] sm:$0xff]
    %v290 = vld [vmem:[#allocation2 + $0x30] sm:$0xff]
    %v291 = vld [vmem:[#allocation2 + $0x38] sm:$0xff]
    %v292 = vld [vmem:[#allocation2 + $0x40] sm:$0xff]
    %v293 = vld [vmem:[#allocation2 + $0x48] sm:$0xff]
    %v294 = vld [vmem:[#allocation2 + $0x50] sm:$0xff]
    %v295 = vld [vmem:[#allocation2 + $0x58] sm:$0xff]
    %v296 = vld [vmem:[#allocation2 + $0x60] sm:$0xff]
    %v297 = vld [vmem:[#allocation2 + $0x68] sm:$0xff]
    %v298 = vld [vmem:[#allocation2 + $0x70] sm:$0xff]
    %v299 = vld [vmem:[#allocation2 + $0x78] sm:$0xff]
    %v300 = vld [vmem:[#allocation2 + $0x80] sm:$0xff]
    %v301 = vld [vmem:[#allocation2 + $0x88] sm:$0xff]
    %v302 = vld [vmem:[#allocation2 + $0x90] sm:$0xff]
    %v303 = vld [vmem:[#allocation2 + $0x98] sm:$0xff]
    %v304 = vld [vmem:[#allocation2 + $0xa0] sm:$0xff]
    %v305 = vld [vmem:[#allocation2 + $0xa8] sm:$0xff]
    %v306 = vld [vmem:[#allocation2 + $0xb0] sm:$0xff]
    %v307 = vld [vmem:[#allocation2 + $0xb8] sm:$0xff]
    %v308 = vld [vmem:[#allocation2 + $0xc0] sm:$0xff]
    %v309 = vld [vmem:[#allocation2 + $0xc8] sm:$0xff]
    %v310 = vld [vmem:[#allocation2 + $0xd0] sm:$0xff]
    %v311 = vld [vmem:[#allocation2 + $0xd8] sm:$0xff]
    %v312 = vld [vmem:[#allocation2 + $0xe0] sm:$0xff]
    %v313 = vld [vmem:[#allocation2 + $0xe8] sm:$0xff]
    %v314 = vld [vmem:[#allocation2 + $0xf0] sm:$0xff]
    %v315 = vld [vmem:[#allocation2 + $0xf8] sm:$0xff]
    %v316 = vld [vmem:[#allocation2 + $0x100] sm:$0xff]
    %v317 = vld [vmem:[#allocation2 + $0x108] sm:$0xff]
    %v318 = vld [vmem:[#allocation2 + $0x110] sm:$0xff]
    %v319 = vld [vmem:[#allocation2 + $0x118] sm:$0xff]
    %v320 = vld [vmem:[#allocation2 + $0x120] sm:$0xff]
    %v321 = vld [vmem:[#allocation2 + $0x128] sm:$0xff]
    %v322 = vld [vmem:[#allocation2 + $0x130] sm:$0xff]
    %v323 = vld [vmem:[#allocation2 + $0x138] sm:$0xff]
    %v324 = vld [vmem:[#allocation2 + $0x140] sm:$0xff]
    %v325 = vld [vmem:[#allocation2 + $0x148] sm:$0xff]
    %v326 = vld [vmem:[#allocation2 + $0x150] sm:$0xff]
    %v327 = vld [vmem:[#allocation2 + $0x158] sm:$0xff]
    %v328 = vld [vmem:[#allocation2 + $0x160] sm:$0xff]
    %v329 = vld [vmem:[#allocation2 + $0x168] sm:$0xff]
    %v330 = vld [vmem:[#allocation2 + $0x170] sm:$0xff]
    %v331 = vld [vmem:[#allocation2 + $0x178] sm:$0xff]
    %v332 = vld [vmem:[#allocation2 + $0x180] sm:$0xff]
    %v333 = vld [vmem:[#allocation2 + $0x188] sm:$0xff]
    %v334 = vld [vmem:[#allocation2 + $0x190] sm:$0xff]
    %v335 = vld [vmem:[#allocation2 + $0x198] sm:$0xff]
    %v336 = vld [vmem:[#allocation2 + $0x1a0] sm:$0xff]
    %v337 = vld [vmem:[#allocation2 + $0x1a8] sm:$0xff]
    %v338 = vld [vmem:[#allocation2 + $0x1b0] sm:$0xff]
    %v339 = vld [vmem:[#allocation2 + $0x1b8] sm:$0xff]
    %v340 = vld [vmem:[#allocation2 + $0x1c0] sm:$0xff]
    %v341 = vld [vmem:[#allocation2 + $0x1c8] sm:$0xff]
    %v342 = vld [vmem:[#allocation2 + $0x1d0] sm:$0xff]
    %v343 = vld [vmem:[#allocation2 + $0x1d8] sm:$0xff]
    %v344 = vld [vmem:[#allocation2 + $0x1e0] sm:$0xff]
    %v345 = vld [vmem:[#allocation2 + $0x1e8] sm:$0xff]
    %v346 = vld [vmem:[#allocation2 + $0x1f0] sm:$0xff]
    %v347 = vld [vmem:[#allocation2 + $0x1f8] sm:$0xff]
    %348 = vmatpush.msra.mxu0 %v344
    %349 = vmatpush.msra.mxu0 %v340
    %350 = vmatpush.msra.mxu0 %v336
    %351 = vmatpush.msra.mxu0 %v332
    %352 = vmatpush.msra.mxu0 %v328
    %353 = vmatpush.msra.mxu0 %v324
    %354 = vmatpush.msra.mxu0 %v320
    %355 = vmatpush.msra.mxu0 %v316
    %356 = vmatpush.msra.mxu0 %v312
    %357 = vmatpush.msra.mxu0 %v308
    %358 = vmatpush.msra.mxu0 %v304
    %359 = vmatpush.msra.mxu0 %v300
    %360 = vmatpush.msra.mxu0 %v296
    %361 = vmatpush.msra.mxu0 %v292
    %362 = vmatpush.msra.mxu0 %v288
    %363 = vmatpush.msra.mxu0 %v284
    %364 = vmatmul.f32.gmra.mxu0 0.0
    %v365 = vpop.f32.mrf.mxu0
    %v366 = vadd.f32 0.0, %v365
    %367 = vdwg.mxu0
    %368 = vmatpush.msra.mxu0 %v345
    %369 = vmatpush.msra.mxu0 %v341
    %370 = vmatpush.msra.mxu0 %v337
    %371 = vmatpush.msra.mxu0 %v333
    %372 = vmatpush.msra.mxu0 %v329
    %373 = vmatpush.msra.mxu0 %v325
    %374 = vmatpush.msra.mxu0 %v321
    %375 = vmatpush.msra.mxu0 %v317
    %376 = vmatpush.msra.mxu0 %v313
    %377 = vmatpush.msra.mxu0 %v309
    %378 = vmatpush.msra.mxu0 %v305
    %379 = vmatpush.msra.mxu0 %v301
    %380 = vmatpush.msra.mxu0 %v297
    %381 = vmatpush.msra.mxu0 %v293
    %382 = vmatpush.msra.mxu0 %v289
    %383 = vmatpush.msra.mxu0 %v285
    %384 = vmatmul.f32.gmra.mxu0 0.0
    %v385 = vpop.f32.mrf.mxu0
    %v386 = vadd.f32 0.0, %v385
    %387 = vdwg.mxu0
    %388 = vmatpush.msra.mxu0 %v346
    %389 = vmatpush.msra.mxu0 %v342
    %390 = vmatpush.msra.mxu0 %v338
    %391 = vmatpush.msra.mxu0 %v334
    %392 = vmatpush.msra.mxu0 %v330
    %393 = vmatpush.msra.mxu0 %v326
    %394 = vmatpush.msra.mxu0 %v322
    %395 = vmatpush.msra.mxu0 %v318
    %396 = vmatpush.msra.mxu0 %v314
    %397 = vmatpush.msra.mxu0 %v310
    %398 = vmatpush.msra.mxu0 %v306
    %399 = vmatpush.msra.mxu0 %v302
    %400 = vmatpush.msra.mxu0 %v298
    %401 = vmatpush.msra.mxu0 %v294
    %402 = vmatpush.msra.mxu0 %v290
    %403 = vmatpush.msra.mxu0 %v286
    %404 = vmatmul.f32.gmra.mxu0 0.0
    %v405 = vpop.f32.mrf.mxu0
    %v406 = vadd.f32 0.0, %v405
    %407 = vdwg.mxu0
    %408 = vmatpush.msra.mxu0 %v347
    %409 = vmatpush.msra.mxu0 %v343
    %410 = vmatpush.msra.mxu0 %v339
    %411 = vmatpush.msra.mxu0 %v335
    %412 = vmatpush.msra.mxu0 %v331
    %413 = vmatpush.msra.mxu0 %v327
    %414 = vmatpush.msra.mxu0 %v323
    %415 = vmatpush.msra.mxu0 %v319
    %416 = vmatpush.msra.mxu0 %v315
    %417 = vmatpush.msra.mxu0 %v311
    %418 = vmatpush.msra.mxu0 %v307
    %419 = vmatpush.msra.mxu0 %v303
    %420 = vmatpush.msra.mxu0 %v299
    %421 = vmatpush.msra.mxu0 %v295
    %422 = vmatpush.msra.mxu0 %v291
    %423 = vmatpush.msra.mxu0 %v287
    %424 = vmatmul.f32.gmra.mxu0 0.0
    %v425 = vpop.f32.mrf.mxu0
    %v426 = vadd.f32 0.0, %v425
    %427 = vdwg.mxu0
    %v428 = vadd.f32 %v138, %v366
    %v429 = vadd.f32 %v179, %v386
    %v430 = vadd.f32 %v220, %v406
    %v431 = vadd.f32 %v261, %v426
    %v432 = vxor.u32 %v428, 2147483648
    %v433 = vxor.u32 %v429, 2147483648
    %v434 = vxor.u32 %v430, 2147483648
    %v435 = vmul.f32 %v432, 1.442695
    %v436 = vpow.pop %v435
    %v437 = vmul.f32 %v433, 1.442695
    %v438 = vpow.pop %v437
    %v439 = vmul.f32 %v434, 1.442695
    %v440 = vpow.pop %v439
    %v441 = vadd.f32 %v436, 1.0
    %v442 = vadd.f32 %v438, 1.0
    %v443 = vadd.f32 %v440, 1.0
    %v444 = vrcp.pop %v441
    %v445 = vmul.f32 %v441, %v444
    %v446 = vsub.f32 1.0, %v445
    %v447 = vmul.f32 %v444, %v446
    %v448 = vadd.f32 %v444, %v447
    %vm449 = vweird.f32 %v441
    %vm450 = vweird.f32 %v444
    %vm451 = vmor %vm449, %vm450
    %v452 = vsel %vm451, %v444, %v448
    %v453 = vand.u32 2147483647, %v441
    %vm454 = vcmp.eq.f32.partialorder %v453, 8.507059e+37
    %v455 = vand.u32 %v441, 2147483648
    %v456 = vor.u32 1.1754944e-38, %v455
    %v457 = vsel %vm454, %v456, %v452
    %v458 = vmul.f32 1.0, %v457
    %v459 = vrcp.pop %v442
    %v460 = vmul.f32 %v442, %v459
    %v461 = vsub.f32 1.0, %v460
    %v462 = vmul.f32 %v459, %v461
    %v463 = vadd.f32 %v459, %v462
    %vm464 = vweird.f32 %v442
    %vm465 = vweird.f32 %v459
    %vm466 = vmor %vm464, %vm465
    %v467 = vsel %vm466, %v459, %v463
    %v468 = vand.u32 2147483647, %v442
    %vm469 = vcmp.eq.f32.partialorder %v468, 8.507059e+37
    %v470 = vand.u32 %v442, 2147483648
    %v471 = vor.u32 1.1754944e-38, %v470
    %v472 = vsel %vm469, %v471, %v467
    %v473 = vmul.f32 1.0, %v472
    %v474 = vrcp.pop %v443
    %v475 = vmul.f32 %v443, %v474
    %v476 = vsub.f32 1.0, %v475
    %v477 = vmul.f32 %v474, %v476
    %v478 = vadd.f32 %v474, %v477
    %vm479 = vweird.f32 %v443
    %vm480 = vweird.f32 %v474
    %vm481 = vmor %vm479, %vm480
    %v482 = vsel %vm481, %v474, %v478
    %v483 = vand.u32 2147483647, %v443
    %vm484 = vcmp.eq.f32.partialorder %v483, 8.507059e+37
    %v485 = vand.u32 %v443, 2147483648
    %v486 = vor.u32 1.1754944e-38, %v485
    %v487 = vsel %vm484, %v486, %v482
    %v488 = vmul.f32 1.0, %v487
    %v489 = vtanh.pop %v431
    %v490 = vmul.f32 %v473, 0.0
    %v491 = vmul.f32 %v458, %v489
    %v492 = vadd.f32 %v490, %v491
    %v493 = vtanh.pop %v492
    %v494 = vmul.f32 %v488, %v493
    %495 = vmatpush.msra.mxu0 %v344
    %496 = vmatpush.msra.mxu0 %v340
    %497 = vmatpush.msra.mxu0 %v336
    %498 = vmatpush.msra.mxu0 %v332
    %499 = vmatpush.msra.mxu0 %v328
    %500 = vmatpush.msra.mxu0 %v324
    %501 = vmatpush.msra.mxu0 %v320
    %502 = vmatpush.msra.mxu0 %v316
    %503 = vmatpush.msra.mxu0 %v312
    %504 = vmatpush.msra.mxu0 %v308
    %505 = vmatpush.msra.mxu0 %v304
    %506 = vmatpush.msra.mxu0 %v300
    %507 = vmatpush.msra.mxu0 %v296
    %508 = vmatpush.msra.mxu0 %v292
    %509 = vmatpush.msra.mxu0 %v288
    %510 = vmatpush.msra.mxu0 %v284
    %511 = vmatmul.f32.gmra.mxu0 %v494
    %v512 = vpop.f32.mrf.mxu0
    %v513 = vadd.f32 0.0, %v512
    %514 = vdwg.mxu0
    %515 = vmatpush.msra.mxu0 %v345
    %516 = vmatpush.msra.mxu0 %v341
    %517 = vmatpush.msra.mxu0 %v337
    %518 = vmatpush.msra.mxu0 %v333
    %519 = vmatpush.msra.mxu0 %v329
    %520 = vmatpush.msra.mxu0 %v325
    %521 = vmatpush.msra.mxu0 %v321
    %522 = vmatpush.msra.mxu0 %v317
    %523 = vmatpush.msra.mxu0 %v313
    %524 = vmatpush.msra.mxu0 %v309
    %525 = vmatpush.msra.mxu0 %v305
    %526 = vmatpush.msra.mxu0 %v301
    %527 = vmatpush.msra.mxu0 %v297
    %528 = vmatpush.msra.mxu0 %v293
    %529 = vmatpush.msra.mxu0 %v289
    %530 = vmatpush.msra.mxu0 %v285
    %531 = vmatmul.f32.gmra.mxu0 %v494
    %v532 = vpop.f32.mrf.mxu0
    %v533 = vadd.f32 0.0, %v532
    %534 = vdwg.mxu0
    %535 = vmatpush.msra.mxu0 %v346
    %536 = vmatpush.msra.mxu0 %v342
    %537 = vmatpush.msra.mxu0 %v338
    %538 = vmatpush.msra.mxu0 %v334
    %539 = vmatpush.msra.mxu0 %v330
    %540 = vmatpush.msra.mxu0 %v326
    %541 = vmatpush.msra.mxu0 %v322
    %542 = vmatpush.msra.mxu0 %v318
    %543 = vmatpush.msra.mxu0 %v314
    %544 = vmatpush.msra.mxu0 %v310
    %545 = vmatpush.msra.mxu0 %v306
    %546 = vmatpush.msra.mxu0 %v302
    %547 = vmatpush.msra.mxu0 %v298
    %548 = vmatpush.msra.mxu0 %v294
    %549 = vmatpush.msra.mxu0 %v290
    %550 = vmatpush.msra.mxu0 %v286
    %551 = vmatmul.f32.gmra.mxu0 %v494
    %v552 = vpop.f32.mrf.mxu0
    %v553 = vadd.f32 0.0, %v552
    %554 = vdwg.mxu0
    %555 = vmatpush.msra.mxu0 %v347
    %556 = vmatpush.msra.mxu0 %v343
    %557 = vmatpush.msra.mxu0 %v339
    %558 = vmatpush.msra.mxu0 %v335
    %559 = vmatpush.msra.mxu0 %v331
    %560 = vmatpush.msra.mxu0 %v327
    %561 = vmatpush.msra.mxu0 %v323
    %562 = vmatpush.msra.mxu0 %v319
    %563 = vmatpush.msra.mxu0 %v315
    %564 = vmatpush.msra.mxu0 %v311
    %565 = vmatpush.msra.mxu0 %v307
    %566 = vmatpush.msra.mxu0 %v303
    %567 = vmatpush.msra.mxu0 %v299
    %568 = vmatpush.msra.mxu0 %v295
    %569 = vmatpush.msra.mxu0 %v291
    %570 = vmatpush.msra.mxu0 %v287
    %571 = vmatmul.f32.gmra.mxu0 %v494
    %v572 = vpop.f32.mrf.mxu0
    %v573 = vadd.f32 0.0, %v572
    %574 = vdwg.mxu0
    %v575 = vadd.f32 %v141, %v513
    %v576 = vadd.f32 %v182, %v533
    %v577 = vadd.f32 %v223, %v553
    %v578 = vadd.f32 %v264, %v573
    %v579 = vxor.u32 %v575, 2147483648
    %v580 = vxor.u32 %v576, 2147483648
    %v581 = vxor.u32 %v577, 2147483648
    %v582 = vmul.f32 %v579, 1.442695
    %v583 = vpow.pop %v582
    %v584 = vmul.f32 %v580, 1.442695
    %v585 = vpow.pop %v584
    %v586 = vmul.f32 %v581, 1.442695
    %v587 = vpow.pop %v586
    %v588 = vadd.f32 %v583, 1.0
    %v589 = vadd.f32 %v585, 1.0
    %v590 = vadd.f32 %v587, 1.0
    %v591 = vrcp.pop %v588
    %v592 = vmul.f32 %v588, %v591
    %v593 = vsub.f32 1.0, %v592
    %v594 = vmul.f32 %v591, %v593
    %v595 = vadd.f32 %v591, %v594
    %vm596 = vweird.f32 %v588
    %vm597 = vweird.f32 %v591
    %vm598 = vmor %vm596, %vm597
    %v599 = vsel %vm598, %v591, %v595
    %v600 = vand.u32 2147483647, %v588
    %vm601 = vcmp.eq.f32.partialorder %v600, 8.507059e+37
    %v602 = vand.u32 %v588, 2147483648
    %v603 = vor.u32 1.1754944e-38, %v602
    %v604 = vsel %vm601, %v603, %v599
    %v605 = vmul.f32 1.0, %v604
    %v606 = vrcp.pop %v589
    %v607 = vmul.f32 %v589, %v606
    %v608 = vsub.f32 1.0, %v607
    %v609 = vmul.f32 %v606, %v608
    %v610 = vadd.f32 %v606, %v609
    %vm611 = vweird.f32 %v589
    %vm612 = vweird.f32 %v606
    %vm613 = vmor %vm611, %vm612
    %v614 = vsel %vm613, %v606, %v610
    %v615 = vand.u32 2147483647, %v589
    %vm616 = vcmp.eq.f32.partialorder %v615, 8.507059e+37
    %v617 = vand.u32 %v589, 2147483648
    %v618 = vor.u32 1.1754944e-38, %v617
    %v619 = vsel %vm616, %v618, %v614
    %v620 = vmul.f32 1.0, %v619
    %v621 = vrcp.pop %v590
    %v622 = vmul.f32 %v590, %v621
    %v623 = vsub.f32 1.0, %v622
    %v624 = vmul.f32 %v621, %v623
    %v625 = vadd.f32 %v621, %v624
    %vm626 = vweird.f32 %v590
    %vm627 = vweird.f32 %v621
    %vm628 = vmor %vm626, %vm627
    %v629 = vsel %vm628, %v621, %v625
    %v630 = vand.u32 2147483647, %v590
    %vm631 = vcmp.eq.f32.partialorder %v630, 8.507059e+37
    %v632 = vand.u32 %v590, 2147483648
    %v633 = vor.u32 1.1754944e-38, %v632
    %v634 = vsel %vm631, %v633, %v629
    %v635 = vmul.f32 1.0, %v634
    %v636 = vtanh.pop %v578
    %v637 = vmul.f32 %v620, %v492
    %v638 = vmul.f32 %v605, %v636
    %v639 = vadd.f32 %v637, %v638
    %v640 = vtanh.pop %v639
    %v641 = vmul.f32 %v635, %v640
    %642 = vmatpush.msra.mxu0 %v344
    %643 = vmatpush.msra.mxu0 %v340
    %644 = vmatpush.msra.mxu0 %v336
    %645 = vmatpush.msra.mxu0 %v332
    %646 = vmatpush.msra.mxu0 %v328
    %647 = vmatpush.msra.mxu0 %v324
    %648 = vmatpush.msra.mxu0 %v320
    %649 = vmatpush.msra.mxu0 %v316
    %650 = vmatpush.msra.mxu0 %v312
    %651 = vmatpush.msra.mxu0 %v308
    %652 = vmatpush.msra.mxu0 %v304
    %653 = vmatpush.msra.mxu0 %v300
    %654 = vmatpush.msra.mxu0 %v296
    %655 = vmatpush.msra.mxu0 %v292
    %656 = vmatpush.msra.mxu0 %v288
    %657 = vmatpush.msra.mxu0 %v284
    %658 = vmatmul.f32.gmra.mxu0 %v641
    %v659 = vpop.f32.mrf.mxu0
    %v660 = vadd.f32 0.0, %v659
    %661 = vdwg.mxu0
    %662 = vmatpush.msra.mxu0 %v345
    %663 = vmatpush.msra.mxu0 %v341
    %664 = vmatpush.msra.mxu0 %v337
    %665 = vmatpush.msra.mxu0 %v333
    %666 = vmatpush.msra.mxu0 %v329
    %667 = vmatpush.msra.mxu0 %v325
    %668 = vmatpush.msra.mxu0 %v321
    %669 = vmatpush.msra.mxu0 %v317
    %670 = vmatpush.msra.mxu0 %v313
    %671 = vmatpush.msra.mxu0 %v309
    %672 = vmatpush.msra.mxu0 %v305
    %673 = vmatpush.msra.mxu0 %v301
    %674 = vmatpush.msra.mxu0 %v297
    %675 = vmatpush.msra.mxu0 %v293
    %676 = vmatpush.msra.mxu0 %v289
    %677 = vmatpush.msra.mxu0 %v285
    %678 = vmatmul.f32.gmra.mxu0 %v641
    %v679 = vpop.f32.mrf.mxu0
    %v680 = vadd.f32 0.0, %v679
    %681 = vdwg.mxu0
    %682 = vmatpush.msra.mxu0 %v346
    %683 = vmatpush.msra.mxu0 %v342
    %684 = vmatpush.msra.mxu0 %v338
    %685 = vmatpush.msra.mxu0 %v334
    %686 = vmatpush.msra.mxu0 %v330
    %687 = vmatpush.msra.mxu0 %v326
    %688 = vmatpush.msra.mxu0 %v322
    %689 = vmatpush.msra.mxu0 %v318
    %690 = vmatpush.msra.mxu0 %v314
    %691 = vmatpush.msra.mxu0 %v310
    %692 = vmatpush.msra.mxu0 %v306
    %693 = vmatpush.msra.mxu0 %v302
    %694 = vmatpush.msra.mxu0 %v298
    %695 = vmatpush.msra.mxu0 %v294
    %696 = vmatpush.msra.mxu0 %v290
    %697 = vmatpush.msra.mxu0 %v286
    %698 = vmatmul.f32.gmra.mxu0 %v641
    %v699 = vpop.f32.mrf.mxu0
    %v700 = vadd.f32 0.0, %v699
    %701 = vdwg.mxu0
    %702 = vmatpush.msra.mxu0 %v347
    %703 = vmatpush.msra.mxu0 %v343
    %704 = vmatpush.msra.mxu0 %v339
    %705 = vmatpush.msra.mxu0 %v335
    %706 = vmatpush.msra.mxu0 %v331
    %707 = vmatpush.msra.mxu0 %v327
    %708 = vmatpush.msra.mxu0 %v323
    %709 = vmatpush.msra.mxu0 %v319
    %710 = vmatpush.msra.mxu0 %v315
    %711 = vmatpush.msra.mxu0 %v311
    %712 = vmatpush.msra.mxu0 %v307
    %713 = vmatpush.msra.mxu0 %v303
    %714 = vmatpush.msra.mxu0 %v299
    %715 = vmatpush.msra.mxu0 %v295
    %716 = vmatpush.msra.mxu0 %v291
    %717 = vmatpush.msra.mxu0 %v287
    %718 = vmatmul.f32.gmra.mxu0 %v641
    %v719 = vpop.f32.mrf.mxu0
    %v720 = vadd.f32 0.0, %v719
    %721 = vdwg.mxu0
    %v722 = vadd.f32 %v144, %v660
    %v723 = vadd.f32 %v185, %v680
    %v724 = vadd.f32 %v226, %v700
    %v725 = vadd.f32 %v267, %v720
    %v726 = vxor.u32 %v722, 2147483648
    %v727 = vxor.u32 %v723, 2147483648
    %v728 = vxor.u32 %v724, 2147483648
    %v729 = vmul.f32 %v726, 1.442695
    %v730 = vpow.pop %v729
    %v731 = vmul.f32 %v727, 1.442695
    %v732 = vpow.pop %v731
    %v733 = vmul.f32 %v728, 1.442695
    %v734 = vpow.pop %v733
    %v735 = vadd.f32 %v730, 1.0
    %v736 = vadd.f32 %v732, 1.0
    %v737 = vadd.f32 %v734, 1.0
    %v738 = vrcp.pop %v735
    %v739 = vmul.f32 %v735, %v738
    %v740 = vsub.f32 1.0, %v739
    %v741 = vmul.f32 %v738, %v740
    %v742 = vadd.f32 %v738, %v741
    %vm743 = vweird.f32 %v735
    %vm744 = vweird.f32 %v738
    %vm745 = vmor %vm743, %vm744
    %v746 = vsel %vm745, %v738, %v742
    %v747 = vand.u32 2147483647, %v735
    %vm748 = vcmp.eq.f32.partialorder %v747, 8.507059e+37
    %v749 = vand.u32 %v735, 2147483648
    %v750 = vor.u32 1.1754944e-38, %v749
    %v751 = vsel %vm748, %v750, %v746
    %v752 = vmul.f32 1.0, %v751
    %v753 = vrcp.pop %v736
    %v754 = vmul.f32 %v736, %v753
    %v755 = vsub.f32 1.0, %v754
    %v756 = vmul.f32 %v753, %v755
    %v757 = vadd.f32 %v753, %v756
    %vm758 = vweird.f32 %v736
    %vm759 = vweird.f32 %v753
    %vm760 = vmor %vm758, %vm759
    %v761 = vsel %vm760, %v753, %v757
    %v762 = vand.u32 2147483647, %v736
    %vm763 = vcmp.eq.f32.partialorder %v762, 8.507059e+37
    %v764 = vand.u32 %v736, 2147483648
    %v765 = vor.u32 1.1754944e-38, %v764
    %v766 = vsel %vm763, %v765, %v761
    %v767 = vmul.f32 1.0, %v766
    %v768 = vrcp.pop %v737
    %v769 = vmul.f32 %v737, %v768
    %v770 = vsub.f32 1.0, %v769
    %v771 = vmul.f32 %v768, %v770
    %v772 = vadd.f32 %v768, %v771
    %vm773 = vweird.f32 %v737
    %vm774 = vweird.f32 %v768
    %vm775 = vmor %vm773, %vm774
    %v776 = vsel %vm775, %v768, %v772
    %v777 = vand.u32 2147483647, %v737
    %vm778 = vcmp.eq.f32.partialorder %v777, 8.507059e+37
    %v779 = vand.u32 %v737, 2147483648
    %v780 = vor.u32 1.1754944e-38, %v779
    %v781 = vsel %vm778, %v780, %v776
    %v782 = vmul.f32 1.0, %v781
    %v783 = vtanh.pop %v725
    %v784 = vmul.f32 %v767, %v639
    %v785 = vmul.f32 %v752, %v783
    %v786 = vadd.f32 %v784, %v785
    %v787 = vtanh.pop %v786
    %v788 = vmul.f32 %v782, %v787
    %789 = vmatpush.msra.mxu0 %v344
    %790 = vmatpush.msra.mxu0 %v340
    %791 = vmatpush.msra.mxu0 %v336
    %792 = vmatpush.msra.mxu0 %v332
    %793 = vmatpush.msra.mxu0 %v328
    %794 = vmatpush.msra.mxu0 %v324
    %795 = vmatpush.msra.mxu0 %v320
    %796 = vmatpush.msra.mxu0 %v316
    %797 = vmatpush.msra.mxu0 %v312
    %798 = vmatpush.msra.mxu0 %v308
    %799 = vmatpush.msra.mxu0 %v304
    %800 = vmatpush.msra.mxu0 %v300
    %801 = vmatpush.msra.mxu0 %v296
    %802 = vmatpush.msra.mxu0 %v292
    %803 = vmatpush.msra.mxu0 %v288
    %804 = vmatpush.msra.mxu0 %v284
    %805 = vmatmul.f32.gmra.mxu0 %v788
    %v806 = vpop.f32.mrf.mxu0
    %v807 = vadd.f32 0.0, %v806
    %808 = vdwg.mxu0
    %809 = vmatpush.msra.mxu0 %v345
    %810 = vmatpush.msra.mxu0 %v341
    %811 = vmatpush.msra.mxu0 %v337
    %812 = vmatpush.msra.mxu0 %v333
    %813 = vmatpush.msra.mxu0 %v329
    %814 = vmatpush.msra.mxu0 %v325
    %815 = vmatpush.msra.mxu0 %v321
    %816 = vmatpush.msra.mxu0 %v317
    %817 = vmatpush.msra.mxu0 %v313
    %818 = vmatpush.msra.mxu0 %v309
    %819 = vmatpush.msra.mxu0 %v305
    %820 = vmatpush.msra.mxu0 %v301
    %821 = vmatpush.msra.mxu0 %v297
    %822 = vmatpush.msra.mxu0 %v293
    %823 = vmatpush.msra.mxu0 %v289
    %824 = vmatpush.msra.mxu0 %v285
    %825 = vmatmul.f32.gmra.mxu0 %v788
    %v826 = vpop.f32.mrf.mxu0
    %v827 = vadd.f32 0.0, %v826
    %828 = vdwg.mxu0
    %829 = vmatpush.msra.mxu0 %v346
    %830 = vmatpush.msra.mxu0 %v342
    %831 = vmatpush.msra.mxu0 %v338
    %832 = vmatpush.msra.mxu0 %v334
    %833 = vmatpush.msra.mxu0 %v330
    %834 = vmatpush.msra.mxu0 %v326
    %835 = vmatpush.msra.mxu0 %v322
    %836 = vmatpush.msra.mxu0 %v318
    %837 = vmatpush.msra.mxu0 %v314
    %838 = vmatpush.msra.mxu0 %v310
    %839 = vmatpush.msra.mxu0 %v306
    %840 = vmatpush.msra.mxu0 %v302
    %841 = vmatpush.msra.mxu0 %v298
    %842 = vmatpush.msra.mxu0 %v294
    %843 = vmatpush.msra.mxu0 %v290
    %844 = vmatpush.msra.mxu0 %v286
    %845 = vmatmul.f32.gmra.mxu0 %v788
    %v846 = vpop.f32.mrf.mxu0
    %v847 = vadd.f32 0.0, %v846
    %848 = vdwg.mxu0
    %849 = vmatpush.msra.mxu0 %v347
    %850 = vmatpush.msra.mxu0 %v343
    %851 = vmatpush.msra.mxu0 %v339
    %852 = vmatpush.msra.mxu0 %v335
    %853 = vmatpush.msra.mxu0 %v331
    %854 = vmatpush.msra.mxu0 %v327
    %855 = vmatpush.msra.mxu0 %v323
    %856 = vmatpush.msra.mxu0 %v319
    %857 = vmatpush.msra.mxu0 %v315
    %858 = vmatpush.msra.mxu0 %v311
    %859 = vmatpush.msra.mxu0 %v307
    %860 = vmatpush.msra.mxu0 %v303
    %861 = vmatpush.msra.mxu0 %v299
    %862 = vmatpush.msra.mxu0 %v295
    %863 = vmatpush.msra.mxu0 %v291
    %864 = vmatpush.msra.mxu0 %v287
    %865 = vmatmul.f32.gmra.mxu0 %v788
    %v866 = vpop.f32.mrf.mxu0
    %v867 = vadd.f32 0.0, %v866
    %868 = vdwg.mxu0
    %v869 = vadd.f32 %v147, %v807
    %v870 = vadd.f32 %v188, %v827
    %v871 = vadd.f32 %v229, %v847
    %v872 = vadd.f32 %v270, %v867
    %v873 = vxor.u32 %v869, 2147483648
    %v874 = vxor.u32 %v870, 2147483648
    %v875 = vxor.u32 %v871, 2147483648
    %v876 = vmul.f32 %v873, 1.442695
    %v877 = vpow.pop %v876
    %v878 = vmul.f32 %v874, 1.442695
    %v879 = vpow.pop %v878
    %v880 = vmul.f32 %v875, 1.442695
    %v881 = vpow.pop %v880
    %v882 = vadd.f32 %v877, 1.0
    %v883 = vadd.f32 %v879, 1.0
    %v884 = vadd.f32 %v881, 1.0
    %v885 = vrcp.pop %v882
    %v886 = vmul.f32 %v882, %v885
    %v887 = vsub.f32 1.0, %v886
    %v888 = vmul.f32 %v885, %v887
    %v889 = vadd.f32 %v885, %v888
    %vm890 = vweird.f32 %v882
    %vm891 = vweird.f32 %v885
    %vm892 = vmor %vm890, %vm891
    %v893 = vsel %vm892, %v885, %v889
    %v894 = vand.u32 2147483647, %v882
    %vm895 = vcmp.eq.f32.partialorder %v894, 8.507059e+37
    %v896 = vand.u32 %v882, 2147483648
    %v897 = vor.u32 1.1754944e-38, %v896
    %v898 = vsel %vm895, %v897, %v893
    %v899 = vmul.f32 1.0, %v898
    %v900 = vrcp.pop %v883
    %v901 = vmul.f32 %v883, %v900
    %v902 = vsub.f32 1.0, %v901
    %v903 = vmul.f32 %v900, %v902
    %v904 = vadd.f32 %v900, %v903
    %vm905 = vweird.f32 %v883
    %vm906 = vweird.f32 %v900
    %vm907 = vmor %vm905, %vm906
    %v908 = vsel %vm907, %v900, %v904
    %v909 = vand.u32 2147483647, %v883
    %vm910 = vcmp.eq.f32.partialorder %v909, 8.507059e+37
    %v911 = vand.u32 %v883, 2147483648
    %v912 = vor.u32 1.1754944e-38, %v911
    %v913 = vsel %vm910, %v912, %v908
    %v914 = vmul.f32 1.0, %v913
    %v915 = vrcp.pop %v884
    %v916 = vmul.f32 %v884, %v915
    %v917 = vsub.f32 1.0, %v916
    %v918 = vmul.f32 %v915, %v917
    %v919 = vadd.f32 %v915, %v918
    %vm920 = vweird.f32 %v884
    %vm921 = vweird.f32 %v915
    %vm922 = vmor %vm920, %vm921
    %v923 = vsel %vm922, %v915, %v919
    %v924 = vand.u32 2147483647, %v884
    %vm925 = vcmp.eq.f32.partialorder %v924, 8.507059e+37
    %v926 = vand.u32 %v884, 2147483648
    %v927 = vor.u32 1.1754944e-38, %v926
    %v928 = vsel %vm925, %v927, %v923
    %v929 = vmul.f32 1.0, %v928
    %v930 = vtanh.pop %v872
    %v931 = vmul.f32 %v914, %v786
    %v932 = vmul.f32 %v899, %v930
    %v933 = vadd.f32 %v931, %v932
    %v934 = vtanh.pop %v933
    %v935 = vmul.f32 %v929, %v934
    %936 = vmatpush.msra.mxu0 %v344
    %937 = vmatpush.msra.mxu0 %v340
    %938 = vmatpush.msra.mxu0 %v336
    %939 = vmatpush.msra.mxu0 %v332
    %940 = vmatpush.msra.mxu0 %v328
    %941 = vmatpush.msra.mxu0 %v324
    %942 = vmatpush.msra.mxu0 %v320
    %943 = vmatpush.msra.mxu0 %v316
    %944 = vmatpush.msra.mxu0 %v312
    %945 = vmatpush.msra.mxu0 %v308
    %946 = vmatpush.msra.mxu0 %v304
    %947 = vmatpush.msra.mxu0 %v300
    %948 = vmatpush.msra.mxu0 %v296
    %949 = vmatpush.msra.mxu0 %v292
    %950 = vmatpush.msra.mxu0 %v288
    %951 = vmatpush.msra.mxu0 %v284
    %952 = vmatmul.f32.gmra.mxu0 %v935
    %v953 = vpop.f32.mrf.mxu0
    %v954 = vadd.f32 0.0, %v953
    %955 = vdwg.mxu0
    %956 = vmatpush.msra.mxu0 %v345
    %957 = vmatpush.msra.mxu0 %v341
    %958 = vmatpush.msra.mxu0 %v337
    %959 = vmatpush.msra.mxu0 %v333
    %960 = vmatpush.msra.mxu0 %v329
    %961 = vmatpush.msra.mxu0 %v325
    %962 = vmatpush.msra.mxu0 %v321
    %963 = vmatpush.msra.mxu0 %v317
    %964 = vmatpush.msra.mxu0 %v313
    %965 = vmatpush.msra.mxu0 %v309
    %966 = vmatpush.msra.mxu0 %v305
    %967 = vmatpush.msra.mxu0 %v301
    %968 = vmatpush.msra.mxu0 %v297
    %969 = vmatpush.msra.mxu0 %v293
    %970 = vmatpush.msra.mxu0 %v289
    %971 = vmatpush.msra.mxu0 %v285
    %972 = vmatmul.f32.gmra.mxu0 %v935
    %v973 = vpop.f32.mrf.mxu0
    %v974 = vadd.f32 0.0, %v973
    %975 = vdwg.mxu0
    %976 = vmatpush.msra.mxu0 %v346
    %977 = vmatpush.msra.mxu0 %v342
    %978 = vmatpush.msra.mxu0 %v338
    %979 = vmatpush.msra.mxu0 %v334
    %980 = vmatpush.msra.mxu0 %v330
    %981 = vmatpush.msra.mxu0 %v326
    %982 = vmatpush.msra.mxu0 %v322
    %983 = vmatpush.msra.mxu0 %v318
    %984 = vmatpush.msra.mxu0 %v314
    %985 = vmatpush.msra.mxu0 %v310
    %986 = vmatpush.msra.mxu0 %v306
    %987 = vmatpush.msra.mxu0 %v302
    %988 = vmatpush.msra.mxu0 %v298
    %989 = vmatpush.msra.mxu0 %v294
    %990 = vmatpush.msra.mxu0 %v290
    %991 = vmatpush.msra.mxu0 %v286
    %992 = vmatmul.f32.gmra.mxu0 %v935
    %v993 = vpop.f32.mrf.mxu0
    %v994 = vadd.f32 0.0, %v993
    %995 = vdwg.mxu0
    %996 = vmatpush.msra.mxu0 %v347
    %997 = vmatpush.msra.mxu0 %v343
    %998 = vmatpush.msra.mxu0 %v339
    %999 = vmatpush.msra.mxu0 %v335
    %1000 = vmatpush.msra.mxu0 %v331
    %1001 = vmatpush.msra.mxu0 %v327
    %1002 = vmatpush.msra.mxu0 %v323
    %1003 = vmatpush.msra.mxu0 %v319
    %1004 = vmatpush.msra.mxu0 %v315
    %1005 = vmatpush.msra.mxu0 %v311
    %1006 = vmatpush.msra.mxu0 %v307
    %1007 = vmatpush.msra.mxu0 %v303
    %1008 = vmatpush.msra.mxu0 %v299
    %1009 = vmatpush.msra.mxu0 %v295
    %1010 = vmatpush.msra.mxu0 %v291
    %1011 = vmatpush.msra.mxu0 %v287
    %1012 = vmatmul.f32.gmra.mxu0 %v935
    %v1013 = vpop.f32.mrf.mxu0
    %v1014 = vadd.f32 0.0, %v1013
    %1015 = vdwg.mxu0
    %v1016 = vadd.f32 %v150, %v954
    %v1017 = vadd.f32 %v191, %v974
    %v1018 = vadd.f32 %v232, %v994
    %v1019 = vadd.f32 %v273, %v1014
    %v1020 = vxor.u32 %v1016, 2147483648
    %v1021 = vxor.u32 %v1017, 2147483648
    %v1022 = vxor.u32 %v1018, 2147483648
    %v1023 = vmul.f32 %v1020, 1.442695
    %v1024 = vpow.pop %v1023
    %v1025 = vmul.f32 %v1021, 1.442695
    %v1026 = vpow.pop %v1025
    %v1027 = vmul.f32 %v1022, 1.442695
    %v1028 = vpow.pop %v1027
    %v1029 = vadd.f32 %v1024, 1.0
    %v1030 = vadd.f32 %v1026, 1.0
    %v1031 = vadd.f32 %v1028, 1.0
    %v1032 = vrcp.pop %v1029
    %v1033 = vmul.f32 %v1029, %v1032
    %v1034 = vsub.f32 1.0, %v1033
    %v1035 = vmul.f32 %v1032, %v1034
    %v1036 = vadd.f32 %v1032, %v1035
    %vm1037 = vweird.f32 %v1029
    %vm1038 = vweird.f32 %v1032
    %vm1039 = vmor %vm1037, %vm1038
    %v1040 = vsel %vm1039, %v1032, %v1036
    %v1041 = vand.u32 2147483647, %v1029
    %vm1042 = vcmp.eq.f32.partialorder %v1041, 8.507059e+37
    %v1043 = vand.u32 %v1029, 2147483648
    %v1044 = vor.u32 1.1754944e-38, %v1043
    %v1045 = vsel %vm1042, %v1044, %v1040
    %v1046 = vmul.f32 1.0, %v1045
    %v1047 = vrcp.pop %v1030
    %v1048 = vmul.f32 %v1030, %v1047
    %v1049 = vsub.f32 1.0, %v1048
    %v1050 = vmul.f32 %v1047, %v1049
    %v1051 = vadd.f32 %v1047, %v1050
    %vm1052 = vweird.f32 %v1030
    %vm1053 = vweird.f32 %v1047
    %vm1054 = vmor %vm1052, %vm1053
    %v1055 = vsel %vm1054, %v1047, %v1051
    %v1056 = vand.u32 2147483647, %v1030
    %vm1057 = vcmp.eq.f32.partialorder %v1056, 8.507059e+37
    %v1058 = vand.u32 %v1030, 2147483648
    %v1059 = vor.u32 1.1754944e-38, %v1058
    %v1060 = vsel %vm1057, %v1059, %v1055
    %v1061 = vmul.f32 1.0, %v1060
    %v1062 = vrcp.pop %v1031
    %v1063 = vmul.f32 %v1031, %v1062
    %v1064 = vsub.f32 1.0, %v1063
    %v1065 = vmul.f32 %v1062, %v1064
    %v1066 = vadd.f32 %v1062, %v1065
    %vm1067 = vweird.f32 %v1031
    %vm1068 = vweird.f32 %v1062
    %vm1069 = vmor %vm1067, %vm1068
    %v1070 = vsel %vm1069, %v1062, %v1066
    %v1071 = vand.u32 2147483647, %v1031
    %vm1072 = vcmp.eq.f32.partialorder %v1071, 8.507059e+37
    %v1073 = vand.u32 %v1031, 2147483648
    %v1074 = vor.u32 1.1754944e-38, %v1073
    %v1075 = vsel %vm1072, %v1074, %v1070
    %v1076 = vmul.f32 1.0, %v1075
    %v1077 = vtanh.pop %v1019
    %v1078 = vmul.f32 %v1061, %v933
    %v1079 = vmul.f32 %v1046, %v1077
    %v1080 = vadd.f32 %v1078, %v1079
    %v1081 = vtanh.pop %v1080
    %v1082 = vmul.f32 %v1076, %v1081
    %1083 = vmatpush.msra.mxu0 %v344
    %1084 = vmatpush.msra.mxu0 %v340
    %1085 = vmatpush.msra.mxu0 %v336
    %1086 = vmatpush.msra.mxu0 %v332
    %1087 = vmatpush.msra.mxu0 %v328
    %1088 = vmatpush.msra.mxu0 %v324
    %1089 = vmatpush.msra.mxu0 %v320
    %1090 = vmatpush.msra.mxu0 %v316
    %1091 = vmatpush.msra.mxu0 %v312
    %1092 = vmatpush.msra.mxu0 %v308
    %1093 = vmatpush.msra.mxu0 %v304
    %1094 = vmatpush.msra.mxu0 %v300
    %1095 = vmatpush.msra.mxu0 %v296
    %1096 = vmatpush.msra.mxu0 %v292
    %1097 = vmatpush.msra.mxu0 %v288
    %1098 = vmatpush.msra.mxu0 %v284
    %1099 = vmatmul.f32.gmra.mxu0 %v1082
    %v1100 = vpop.f32.mrf.mxu0
    %v1101 = vadd.f32 0.0, %v1100
    %1102 = vdwg.mxu0
    %1103 = vmatpush.msra.mxu0 %v345
    %1104 = vmatpush.msra.mxu0 %v341
    %1105 = vmatpush.msra.mxu0 %v337
    %1106 = vmatpush.msra.mxu0 %v333
    %1107 = vmatpush.msra.mxu0 %v329
    %1108 = vmatpush.msra.mxu0 %v325
    %1109 = vmatpush.msra.mxu0 %v321
    %1110 = vmatpush.msra.mxu0 %v317
    %1111 = vmatpush.msra.mxu0 %v313
    %1112 = vmatpush.msra.mxu0 %v309
    %1113 = vmatpush.msra.mxu0 %v305
    %1114 = vmatpush.msra.mxu0 %v301
    %1115 = vmatpush.msra.mxu0 %v297
    %1116 = vmatpush.msra.mxu0 %v293
    %1117 = vmatpush.msra.mxu0 %v289
    %1118 = vmatpush.msra.mxu0 %v285
    %1119 = vmatmul.f32.gmra.mxu0 %v1082
    %v1120 = vpop.f32.mrf.mxu0
    %v1121 = vadd.f32 0.0, %v1120
    %1122 = vdwg.mxu0
    %1123 = vmatpush.msra.mxu0 %v346
    %1124 = vmatpush.msra.mxu0 %v342
    %1125 = vmatpush.msra.mxu0 %v338
    %1126 = vmatpush.msra.mxu0 %v334
    %1127 = vmatpush.msra.mxu0 %v330
    %1128 = vmatpush.msra.mxu0 %v326
    %1129 = vmatpush.msra.mxu0 %v322
    %1130 = vmatpush.msra.mxu0 %v318
    %1131 = vmatpush.msra.mxu0 %v314
    %1132 = vmatpush.msra.mxu0 %v310
    %1133 = vmatpush.msra.mxu0 %v306
    %1134 = vmatpush.msra.mxu0 %v302
    %1135 = vmatpush.msra.mxu0 %v298
    %1136 = vmatpush.msra.mxu0 %v294
    %1137 = vmatpush.msra.mxu0 %v290
    %1138 = vmatpush.msra.mxu0 %v286
    %1139 = vmatmul.f32.gmra.mxu0 %v1082
    %v1140 = vpop.f32.mrf.mxu0
    %v1141 = vadd.f32 0.0, %v1140
    %1142 = vdwg.mxu0
    %1143 = vmatpush.msra.mxu0 %v347
    %1144 = vmatpush.msra.mxu0 %v343
    %1145 = vmatpush.msra.mxu0 %v339
    %1146 = vmatpush.msra.mxu0 %v335
    %1147 = vmatpush.msra.mxu0 %v331
    %1148 = vmatpush.msra.mxu0 %v327
    %1149 = vmatpush.msra.mxu0 %v323
    %1150 = vmatpush.msra.mxu0 %v319
    %1151 = vmatpush.msra.mxu0 %v315
    %1152 = vmatpush.msra.mxu0 %v311
    %1153 = vmatpush.msra.mxu0 %v307
    %1154 = vmatpush.msra.mxu0 %v303
    %1155 = vmatpush.msra.mxu0 %v299
    %1156 = vmatpush.msra.mxu0 %v295
    %1157 = vmatpush.msra.mxu0 %v291
    %1158 = vmatpush.msra.mxu0 %v287
    %1159 = vmatmul.f32.gmra.mxu0 %v1082
    %v1160 = vpop.f32.mrf.mxu0
    %v1161 = vadd.f32 0.0, %v1160
    %1162 = vdwg.mxu0
    %v1163 = vadd.f32 %v153, %v1101
    %v1164 = vadd.f32 %v194, %v1121
    %v1165 = vadd.f32 %v235, %v1141
    %v1166 = vadd.f32 %v276, %v1161
    %v1167 = vxor.u32 %v1163, 2147483648
    %v1168 = vxor.u32 %v1164, 2147483648
    %v1169 = vxor.u32 %v1165, 2147483648
    %v1170 = vmul.f32 %v1167, 1.442695
    %v1171 = vpow.pop %v1170
    %v1172 = vmul.f32 %v1168, 1.442695
    %v1173 = vpow.pop %v1172
    %v1174 = vmul.f32 %v1169, 1.442695
    %v1175 = vpow.pop %v1174
    %v1176 = vadd.f32 %v1171, 1.0
    %v1177 = vadd.f32 %v1173, 1.0
    %v1178 = vadd.f32 %v1175, 1.0
    %v1179 = vrcp.pop %v1176
    %v1180 = vmul.f32 %v1176, %v1179
    %v1181 = vsub.f32 1.0, %v1180
    %v1182 = vmul.f32 %v1179, %v1181
    %v1183 = vadd.f32 %v1179, %v1182
    %vm1184 = vweird.f32 %v1176
    %vm1185 = vweird.f32 %v1179
    %vm1186 = vmor %vm1184, %vm1185
    %v1187 = vsel %vm1186, %v1179, %v1183
    %v1188 = vand.u32 2147483647, %v1176
    %vm1189 = vcmp.eq.f32.partialorder %v1188, 8.507059e+37
    %v1190 = vand.u32 %v1176, 2147483648
    %v1191 = vor.u32 1.1754944e-38, %v1190
    %v1192 = vsel %vm1189, %v1191, %v1187
    %v1193 = vmul.f32 1.0, %v1192
    %v1194 = vrcp.pop %v1177
    %v1195 = vmul.f32 %v1177, %v1194
    %v1196 = vsub.f32 1.0, %v1195
    %v1197 = vmul.f32 %v1194, %v1196
    %v1198 = vadd.f32 %v1194, %v1197
    %vm1199 = vweird.f32 %v1177
    %vm1200 = vweird.f32 %v1194
    %vm1201 = vmor %vm1199, %vm1200
    %v1202 = vsel %vm1201, %v1194, %v1198
    %v1203 = vand.u32 2147483647, %v1177
    %vm1204 = vcmp.eq.f32.partialorder %v1203, 8.507059e+37
    %v1205 = vand.u32 %v1177, 2147483648
    %v1206 = vor.u32 1.1754944e-38, %v1205
    %v1207 = vsel %vm1204, %v1206, %v1202
    %v1208 = vmul.f32 1.0, %v1207
    %v1209 = vrcp.pop %v1178
    %v1210 = vmul.f32 %v1178, %v1209
    %v1211 = vsub.f32 1.0, %v1210
    %v1212 = vmul.f32 %v1209, %v1211
    %v1213 = vadd.f32 %v1209, %v1212
    %vm1214 = vweird.f32 %v1178
    %vm1215 = vweird.f32 %v1209
    %vm1216 = vmor %vm1214, %vm1215
    %v1217 = vsel %vm1216, %v1209, %v1213
    %v1218 = vand.u32 2147483647, %v1178
    %vm1219 = vcmp.eq.f32.partialorder %v1218, 8.507059e+37
    %v1220 = vand.u32 %v1178, 2147483648
    %v1221 = vor.u32 1.1754944e-38, %v1220
    %v1222 = vsel %vm1219, %v1221, %v1217
    %v1223 = vmul.f32 1.0, %v1222
    %v1224 = vtanh.pop %v1166
    %v1225 = vmul.f32 %v1208, %v1080
    %v1226 = vmul.f32 %v1193, %v1224
    %v1227 = vadd.f32 %v1225, %v1226
    %v1228 = vtanh.pop %v1227
    %v1229 = vmul.f32 %v1223, %v1228
    %1230 = vmatpush.msra.mxu0 %v344
    %1231 = vmatpush.msra.mxu0 %v340
    %1232 = vmatpush.msra.mxu0 %v336
    %1233 = vmatpush.msra.mxu0 %v332
    %1234 = vmatpush.msra.mxu0 %v328
    %1235 = vmatpush.msra.mxu0 %v324
    %1236 = vmatpush.msra.mxu0 %v320
    %1237 = vmatpush.msra.mxu0 %v316
    %1238 = vmatpush.msra.mxu0 %v312
    %1239 = vmatpush.msra.mxu0 %v308
    %1240 = vmatpush.msra.mxu0 %v304
    %1241 = vmatpush.msra.mxu0 %v300
    %1242 = vmatpush.msra.mxu0 %v296
    %1243 = vmatpush.msra.mxu0 %v292
    %1244 = vmatpush.msra.mxu0 %v288
    %1245 = vmatpush.msra.mxu0 %v284
    %1246 = vmatmul.f32.gmra.mxu0 %v1229
    %v1247 = vpop.f32.mrf.mxu0
    %v1248 = vadd.f32 0.0, %v1247
    %1249 = vdwg.mxu0
    %1250 = vmatpush.msra.mxu0 %v345
    %1251 = vmatpush.msra.mxu0 %v341
    %1252 = vmatpush.msra.mxu0 %v337
    %1253 = vmatpush.msra.mxu0 %v333
    %1254 = vmatpush.msra.mxu0 %v329
    %1255 = vmatpush.msra.mxu0 %v325
    %1256 = vmatpush.msra.mxu0 %v321
    %1257 = vmatpush.msra.mxu0 %v317
    %1258 = vmatpush.msra.mxu0 %v313
    %1259 = vmatpush.msra.mxu0 %v309
    %1260 = vmatpush.msra.mxu0 %v305
    %1261 = vmatpush.msra.mxu0 %v301
    %1262 = vmatpush.msra.mxu0 %v297
    %1263 = vmatpush.msra.mxu0 %v293
    %1264 = vmatpush.msra.mxu0 %v289
    %1265 = vmatpush.msra.mxu0 %v285
    %1266 = vmatmul.f32.gmra.mxu0 %v1229
    %v1267 = vpop.f32.mrf.mxu0
    %v1268 = vadd.f32 0.0, %v1267
    %1269 = vdwg.mxu0
    %1270 = vmatpush.msra.mxu0 %v346
    %1271 = vmatpush.msra.mxu0 %v342
    %1272 = vmatpush.msra.mxu0 %v338
    %1273 = vmatpush.msra.mxu0 %v334
    %1274 = vmatpush.msra.mxu0 %v330
    %1275 = vmatpush.msra.mxu0 %v326
    %1276 = vmatpush.msra.mxu0 %v322
    %1277 = vmatpush.msra.mxu0 %v318
    %1278 = vmatpush.msra.mxu0 %v314
    %1279 = vmatpush.msra.mxu0 %v310
    %1280 = vmatpush.msra.mxu0 %v306
    %1281 = vmatpush.msra.mxu0 %v302
    %1282 = vmatpush.msra.mxu0 %v298
    %1283 = vmatpush.msra.mxu0 %v294
    %1284 = vmatpush.msra.mxu0 %v290
    %1285 = vmatpush.msra.mxu0 %v286
    %1286 = vmatmul.f32.gmra.mxu0 %v1229
    %v1287 = vpop.f32.mrf.mxu0
    %v1288 = vadd.f32 0.0, %v1287
    %1289 = vdwg.mxu0
    %1290 = vmatpush.msra.mxu0 %v347
    %1291 = vmatpush.msra.mxu0 %v343
    %1292 = vmatpush.msra.mxu0 %v339
    %1293 = vmatpush.msra.mxu0 %v335
    %1294 = vmatpush.msra.mxu0 %v331
    %1295 = vmatpush.msra.mxu0 %v327
    %1296 = vmatpush.msra.mxu0 %v323
    %1297 = vmatpush.msra.mxu0 %v319
    %1298 = vmatpush.msra.mxu0 %v315
    %1299 = vmatpush.msra.mxu0 %v311
    %1300 = vmatpush.msra.mxu0 %v307
    %1301 = vmatpush.msra.mxu0 %v303
    %1302 = vmatpush.msra.mxu0 %v299
    %1303 = vmatpush.msra.mxu0 %v295
    %1304 = vmatpush.msra.mxu0 %v291
    %1305 = vmatpush.msra.mxu0 %v287
    %1306 = vmatmul.f32.gmra.mxu0 %v1229
    %v1307 = vpop.f32.mrf.mxu0
    %v1308 = vadd.f32 0.0, %v1307
    %1309 = vdwg.mxu0
    %v1310 = vadd.f32 %v156, %v1248
    %v1311 = vadd.f32 %v197, %v1268
    %v1312 = vadd.f32 %v238, %v1288
    %v1313 = vadd.f32 %v279, %v1308
    %v1314 = vxor.u32 %v1310, 2147483648
    %v1315 = vxor.u32 %v1311, 2147483648
    %v1316 = vxor.u32 %v1312, 2147483648
    %v1317 = vmul.f32 %v1314, 1.442695
    %v1318 = vpow.pop %v1317
    %v1319 = vmul.f32 %v1315, 1.442695
    %v1320 = vpow.pop %v1319
    %v1321 = vmul.f32 %v1316, 1.442695
    %v1322 = vpow.pop %v1321
    %v1323 = vadd.f32 %v1318, 1.0
    %v1324 = vadd.f32 %v1320, 1.0
    %v1325 = vadd.f32 %v1322, 1.0
    %v1326 = vrcp.pop %v1323
    %v1327 = vmul.f32 %v1323, %v1326
    %v1328 = vsub.f32 1.0, %v1327
    %v1329 = vmul.f32 %v1326, %v1328
    %v1330 = vadd.f32 %v1326, %v1329
    %vm1331 = vweird.f32 %v1323
    %vm1332 = vweird.f32 %v1326
    %vm1333 = vmor %vm1331, %vm1332
    %v1334 = vsel %vm1333, %v1326, %v1330
    %v1335 = vand.u32 2147483647, %v1323
    %vm1336 = vcmp.eq.f32.partialorder %v1335, 8.507059e+37
    %v1337 = vand.u32 %v1323, 2147483648
    %v1338 = vor.u32 1.1754944e-38, %v1337
    %v1339 = vsel %vm1336, %v1338, %v1334
    %v1340 = vmul.f32 1.0, %v1339
    %v1341 = vrcp.pop %v1324
    %v1342 = vmul.f32 %v1324, %v1341
    %v1343 = vsub.f32 1.0, %v1342
    %v1344 = vmul.f32 %v1341, %v1343
    %v1345 = vadd.f32 %v1341, %v1344
    %vm1346 = vweird.f32 %v1324
    %vm1347 = vweird.f32 %v1341
    %vm1348 = vmor %vm1346, %vm1347
    %v1349 = vsel %vm1348, %v1341, %v1345
    %v1350 = vand.u32 2147483647, %v1324
    %vm1351 = vcmp.eq.f32.partialorder %v1350, 8.507059e+37
    %v1352 = vand.u32 %v1324, 2147483648
    %v1353 = vor.u32 1.1754944e-38, %v1352
    %v1354 = vsel %vm1351, %v1353, %v1349
    %v1355 = vmul.f32 1.0, %v1354
    %v1356 = vrcp.pop %v1325
    %v1357 = vmul.f32 %v1325, %v1356
    %v1358 = vsub.f32 1.0, %v1357
    %v1359 = vmul.f32 %v1356, %v1358
    %v1360 = vadd.f32 %v1356, %v1359
    %vm1361 = vweird.f32 %v1325
    %vm1362 = vweird.f32 %v1356
    %vm1363 = vmor %vm1361, %vm1362
    %v1364 = vsel %vm1363, %v1356, %v1360
    %v1365 = vand.u32 2147483647, %v1325
    %vm1366 = vcmp.eq.f32.partialorder %v1365, 8.507059e+37
    %v1367 = vand.u32 %v1325, 2147483648
    %v1368 = vor.u32 1.1754944e-38, %v1367
    %v1369 = vsel %vm1366, %v1368, %v1364
    %v1370 = vmul.f32 1.0, %v1369
    %v1371 = vtanh.pop %v1313
    %v1372 = vmul.f32 %v1355, %v1227
    %v1373 = vmul.f32 %v1340, %v1371
    %v1374 = vadd.f32 %v1372, %v1373
    %v1375 = vtanh.pop %v1374
    %v1376 = vmul.f32 %v1370, %v1375
    %1377 = vmatpush.msra.mxu0 %v344
    %1378 = vmatpush.msra.mxu0 %v340
    %1379 = vmatpush.msra.mxu0 %v336
    %1380 = vmatpush.msra.mxu0 %v332
    %1381 = vmatpush.msra.mxu0 %v328
    %1382 = vmatpush.msra.mxu0 %v324
    %1383 = vmatpush.msra.mxu0 %v320
    %1384 = vmatpush.msra.mxu0 %v316
    %1385 = vmatpush.msra.mxu0 %v312
    %1386 = vmatpush.msra.mxu0 %v308
    %1387 = vmatpush.msra.mxu0 %v304
    %1388 = vmatpush.msra.mxu0 %v300
    %1389 = vmatpush.msra.mxu0 %v296
    %1390 = vmatpush.msra.mxu0 %v292
    %1391 = vmatpush.msra.mxu0 %v288
    %1392 = vmatpush.msra.mxu0 %v284
    %1393 = vmatmul.f32.gmra.mxu0 %v1376
    %v1394 = vpop.f32.mrf.mxu0
    %v1395 = vadd.f32 0.0, %v1394
    %1396 = vdwg.mxu0
    %1397 = vmatpush.msra.mxu0 %v345
    %1398 = vmatpush.msra.mxu0 %v341
    %1399 = vmatpush.msra.mxu0 %v337
    %1400 = vmatpush.msra.mxu0 %v333
    %1401 = vmatpush.msra.mxu0 %v329
    %1402 = vmatpush.msra.mxu0 %v325
    %1403 = vmatpush.msra.mxu0 %v321
    %1404 = vmatpush.msra.mxu0 %v317
    %1405 = vmatpush.msra.mxu0 %v313
    %1406 = vmatpush.msra.mxu0 %v309
    %1407 = vmatpush.msra.mxu0 %v305
    %1408 = vmatpush.msra.mxu0 %v301
    %1409 = vmatpush.msra.mxu0 %v297
    %1410 = vmatpush.msra.mxu0 %v293
    %1411 = vmatpush.msra.mxu0 %v289
    %1412 = vmatpush.msra.mxu0 %v285
    %1413 = vmatmul.f32.gmra.mxu0 %v1376
    %v1414 = vpop.f32.mrf.mxu0
    %v1415 = vadd.f32 0.0, %v1414
    %1416 = vdwg.mxu0
    %1417 = vmatpush.msra.mxu0 %v346
    %1418 = vmatpush.msra.mxu0 %v342
    %1419 = vmatpush.msra.mxu0 %v338
    %1420 = vmatpush.msra.mxu0 %v334
    %1421 = vmatpush.msra.mxu0 %v330
    %1422 = vmatpush.msra.mxu0 %v326
    %1423 = vmatpush.msra.mxu0 %v322
    %1424 = vmatpush.msra.mxu0 %v318
    %1425 = vmatpush.msra.mxu0 %v314
    %1426 = vmatpush.msra.mxu0 %v310
    %1427 = vmatpush.msra.mxu0 %v306
    %1428 = vmatpush.msra.mxu0 %v302
    %1429 = vmatpush.msra.mxu0 %v298
    %1430 = vmatpush.msra.mxu0 %v294
    %1431 = vmatpush.msra.mxu0 %v290
    %1432 = vmatpush.msra.mxu0 %v286
    %1433 = vmatmul.f32.gmra.mxu0 %v1376
    %v1434 = vpop.f32.mrf.mxu0
    %v1435 = vadd.f32 0.0, %v1434
    %1436 = vdwg.mxu0
    %1437 = vmatpush.msra.mxu0 %v347
    %1438 = vmatpush.msra.mxu0 %v343
    %1439 = vmatpush.msra.mxu0 %v339
    %1440 = vmatpush.msra.mxu0 %v335
    %1441 = vmatpush.msra.mxu0 %v331
    %1442 = vmatpush.msra.mxu0 %v327
    %1443 = vmatpush.msra.mxu0 %v323
    %1444 = vmatpush.msra.mxu0 %v319
    %1445 = vmatpush.msra.mxu0 %v315
    %1446 = vmatpush.msra.mxu0 %v311
    %1447 = vmatpush.msra.mxu0 %v307
    %1448 = vmatpush.msra.mxu0 %v303
    %1449 = vmatpush.msra.mxu0 %v299
    %1450 = vmatpush.msra.mxu0 %v295
    %1451 = vmatpush.msra.mxu0 %v291
    %1452 = vmatpush.msra.mxu0 %v287
    %1453 = vmatmul.f32.gmra.mxu0 %v1376
    %v1454 = vpop.f32.mrf.mxu0
    %v1455 = vadd.f32 0.0, %v1454
    %1456 = vdwg.mxu0
    %v1457 = vadd.f32 %v159, %v1395
    %v1458 = vadd.f32 %v200, %v1415
    %v1459 = vadd.f32 %v241, %v1435
    %v1460 = vadd.f32 %v282, %v1455
    %v1461 = vxor.u32 %v1457, 2147483648
    %v1462 = vxor.u32 %v1458, 2147483648
    %v1463 = vxor.u32 %v1459, 2147483648
    %v1464 = vmul.f32 %v1461, 1.442695
    %v1465 = vpow.pop %v1464
    %v1466 = vmul.f32 %v1462, 1.442695
    %v1467 = vpow.pop %v1466
    %v1468 = vmul.f32 %v1463, 1.442695
    %v1469 = vpow.pop %v1468
    %v1470 = vadd.f32 %v1465, 1.0
    %v1471 = vadd.f32 %v1467, 1.0
    %v1472 = vadd.f32 %v1469, 1.0
    %v1473 = vrcp.pop %v1470
    %v1474 = vmul.f32 %v1470, %v1473
    %v1475 = vsub.f32 1.0, %v1474
    %v1476 = vmul.f32 %v1473, %v1475
    %v1477 = vadd.f32 %v1473, %v1476
    %vm1478 = vweird.f32 %v1470
    %vm1479 = vweird.f32 %v1473
    %vm1480 = vmor %vm1478, %vm1479
    %v1481 = vsel %vm1480, %v1473, %v1477
    %v1482 = vand.u32 2147483647, %v1470
    %vm1483 = vcmp.eq.f32.partialorder %v1482, 8.507059e+37
    %v1484 = vand.u32 %v1470, 2147483648
    %v1485 = vor.u32 1.1754944e-38, %v1484
    %v1486 = vsel %vm1483, %v1485, %v1481
    %v1487 = vmul.f32 1.0, %v1486
    %v1488 = vrcp.pop %v1471
    %v1489 = vmul.f32 %v1471, %v1488
    %v1490 = vsub.f32 1.0, %v1489
    %v1491 = vmul.f32 %v1488, %v1490
    %v1492 = vadd.f32 %v1488, %v1491
    %vm1493 = vweird.f32 %v1471
    %vm1494 = vweird.f32 %v1488
    %vm1495 = vmor %vm1493, %vm1494
    %v1496 = vsel %vm1495, %v1488, %v1492
    %v1497 = vand.u32 2147483647, %v1471
    %vm1498 = vcmp.eq.f32.partialorder %v1497, 8.507059e+37
    %v1499 = vand.u32 %v1471, 2147483648
    %v1500 = vor.u32 1.1754944e-38, %v1499
    %v1501 = vsel %vm1498, %v1500, %v1496
    %v1502 = vmul.f32 1.0, %v1501
    %v1503 = vrcp.pop %v1472
    %v1504 = vmul.f32 %v1472, %v1503
    %v1505 = vsub.f32 1.0, %v1504
    %v1506 = vmul.f32 %v1503, %v1505
    %v1507 = vadd.f32 %v1503, %v1506
    %vm1508 = vweird.f32 %v1472
    %vm1509 = vweird.f32 %v1503
    %vm1510 = vmor %vm1508, %vm1509
    %v1511 = vsel %vm1510, %v1503, %v1507
    %v1512 = vand.u32 2147483647, %v1472
    %vm1513 = vcmp.eq.f32.partialorder %v1512, 8.507059e+37
    %v1514 = vand.u32 %v1472, 2147483648
    %v1515 = vor.u32 1.1754944e-38, %v1514
    %v1516 = vsel %vm1513, %v1515, %v1511
    %v1517 = vmul.f32 1.0, %v1516
    %v1518 = vtanh.pop %v1460
    %v1519 = vmul.f32 %v1502, %v1374
    %v1520 = vmul.f32 %v1487, %v1518
    %v1521 = vadd.f32 %v1519, %v1520
    %v1522 = vtanh.pop %v1521
    %v1523 = vmul.f32 %v1517, %v1522
    %v1524 = vld [vmem:[#allocation5] sm:$0xff]
    %v1525 = vld [vmem:[#allocation5 + $0x8] sm:$0xff]
    %v1526 = vld [vmem:[#allocation5 + $0x10] sm:$0xff]
    %v1527 = vld [vmem:[#allocation5 + $0x18] sm:$0xff]
    %v1528 = vld [vmem:[#allocation5 + $0x20] sm:$0xff]
    %v1529 = vld [vmem:[#allocation5 + $0x28] sm:$0xff]
    %v1530 = vld [vmem:[#allocation5 + $0x30] sm:$0xff]
    %v1531 = vld [vmem:[#allocation5 + $0x38] sm:$0xff]
    %v1532 = vld [vmem:[#allocation5 + $0x40] sm:$0xff]
    %v1533 = vld [vmem:[#allocation5 + $0x48] sm:$0xff]
    %v1534 = vld [vmem:[#allocation5 + $0x50] sm:$0xff]
    %v1535 = vld [vmem:[#allocation5 + $0x58] sm:$0xff]
    %v1536 = vld [vmem:[#allocation5 + $0x60] sm:$0xff]
    %v1537 = vld [vmem:[#allocation5 + $0x68] sm:$0xff]
    %v1538 = vld [vmem:[#allocation5 + $0x70] sm:$0xff]
    %v1539 = vld [vmem:[#allocation5 + $0x78] sm:$0xff]
    %v1540 = vld [vmem:[%s5] sm:$0x1]
    %v1542 = vperm.slane %v1540, 0
    %1544 = vmatpush.msra.mxu0 %v1539
    %1545 = vmatpush.msra.mxu0 %v1538
    %1546 = vmatpush.msra.mxu0 %v1537
    %1547 = vmatpush.msra.mxu0 %v1536
    %1548 = vmatpush.msra.mxu0 %v1535
    %1549 = vmatpush.msra.mxu0 %v1534
    %1550 = vmatpush.msra.mxu0 %v1533
    %1551 = vmatpush.msra.mxu0 %v1532
    %1552 = vmatpush.msra.mxu0 %v1531
    %1553 = vmatpush.msra.mxu0 %v1530
    %1554 = vmatpush.msra.mxu0 %v1529
    %1555 = vmatpush.msra.mxu0 %v1528
    %1556 = vmatpush.msra.mxu0 %v1527
    %1557 = vmatpush.msra.mxu0 %v1526
    %1558 = vmatpush.msra.mxu0 %v1525
    %1559 = vmatpush.msra.mxu0 %v1524
    %1560 = vmatmul.f32.gmra.mxu0 %v1523
    %v1561 = vpop.f32.mrf.mxu0
    %v1562 = vadd.f32 %v1542, %v1561
    %1563 = vdwg.mxu0
    %1564 = vst [vmem:[#allocation7] sm:$0xff] %v1562
    // Predicated region
    $region34: #{tpu_custom_call.1} parent=1 // pred_check
      _
    $region35: #{tpu_custom_call.1} parent=1 // pred_check_branch
      %1566 = sbr.rel (0) target = $region37
    $region36: #{tpu_custom_call.1} parent=1 // pred_region
      %1568 = vsyncadd [#allocation4], 0
      %s1570 = sshll.u32 [#allocation7], 4
      %s1571 = int_to_ptr.vmem [resolvable:$true] %s1570
      %s1572 = sshll.u32 %s6, 4
      %s1573 = int_to_ptr.hbm [resolvable:$true] %s1572
      %1575 = dma.vmem_to_hbm [thread:$0]  %s1571, 128, %s1573, [#allocation4]
    $region37: #{tpu_custom_call.1} parent=1 // pred_fallthru
      _
    // Predicated region
    $region38: #{tpu_custom_call.1} parent=1 // pred_check
      _
    $region39: #{tpu_custom_call.1} parent=1 // pred_check_branch
      %1577 = sbr.rel (0) target = $region41
    $region40: #{tpu_custom_call.1} parent=1 // pred_region
      %1579 = dma.done [#allocation4], 128
    $region41: #{tpu_custom_call.1} parent=1 // pred_fallthru
      _
    %1580 = vsyncpa [#allocation3], 1
    %1581 = vsyncpa [#allocation6], 1
    %1582 = vsyncpa [#allocation4], 1

</llo_original>
